<compile_context>
chip_gen: v7x
topology: tpu7x:2x2x1
jax: 0.10.0
libtpu: 0.0.40
codegen_flags: <defaults>
</compile_context>

<pallas_src>
import functools

import jax
import jax.numpy as jnp
from jax import lax
from jax.experimental import pallas as pl
from jax.experimental.pallas import tpu as pltpu


def _round_up(x: int, m: int) -> int:
    return ((x + m - 1) // m) * m


def _cdiv(a: int, b: int) -> int:
    return (a + b - 1) // b


def _nt_xent_lse_kernel(zr_ref, zc_ref, out_ref, m_ref, l_ref, *,
                        inv_temp: float, n_valid: int, tm: int, tc: int,
                        mask_padding: bool):
    i = pl.program_id(0)          # row block       (parallel)
    j = pl.program_id(1)          # column block    (online-softmax reduction)

    @pl.when(j == 0)
    def _init():
        m_ref[...] = jnp.full_like(m_ref, -1e30)
        l_ref[...] = jnp.zeros_like(l_ref)

    # (tm, tc) similarity tile: bf16 MXU operands with f32 accumulation.  NT
    # form (contract the last dim of both operands) -> no transposed copy of
    # zn is ever materialized; 1/temperature folded into one per-tile multiply.
    s = lax.dot_general(zr_ref[...], zc_ref[...],
                        dimension_numbers=(((1,), (1,)), ((), ())),
                        preferred_element_type=jnp.float32)
    s = s * jnp.float32(inv_temp)

    # Exclude the self-similarity diagonal (and zero-padded columns, only when
    # such padding exists — static check) from the softmax denominator.  Local
    # iotas plus one scalar offset; masking before the running max keeps the
    # online logsumexp robust for any temperature.
    row_it = lax.broadcasted_iota(jnp.int32, (tm, tc), 0)
    col_it = lax.broadcasted_iota(jnp.int32, (tm, tc), 1)
    bad = (col_it - row_it) == (i * tm - j * tc)          # global diagonal
    if mask_padding:
        bad = bad | (col_it >= n_valid - j * tc)          # zero-padded columns
    s = jnp.where(bad, jnp.float32(-1e30), s)

    # Online (flash-style) numerically stable logsumexp over column blocks.
    m_prev = m_ref[...]
    m_new = jnp.maximum(m_prev, jnp.max(s, axis=-1, keepdims=True))
    l_ref[...] = (jnp.exp(m_prev - m_new) * l_ref[...]
                  + jnp.sum(jnp.exp(s - m_new), axis=-1, keepdims=True))
    m_ref[...] = m_new

    @pl.when(j == pl.num_programs(1) - 1)
    def _finalize():
        out_ref[...] = m_ref[...] + jnp.log(l_ref[...])


def _vmem_budget() -> tuple:
    """(vmem_limit_bytes, max column tile) chosen per TPU generation."""
    try:
        kind = jax.devices()[0].device_kind.lower()
    except Exception:
        kind = ""
    if "v7" in kind:
        # v7x: only 64 MiB physical VMEM and 2 TCs per chip -> stay well below.
        return 40 * 1024 * 1024, 1024
    if "v5" in kind or "v6" in kind:
        # v5e/v6e: 128 MiB physical VMEM -> raise the scoped limit, big tiles.
        return 64 * 1024 * 1024, 2048
    return 32 * 1024 * 1024, 1024


def _vmem_estimate(tm: int, tc: int, d_pad: int) -> int:
    # double-buffered bf16 row/column streams + f32 logits tile and its
    # elementwise intermediates (mask / exp) the compiler keeps in VMEM.
    return 2 * 2 * d_pad * (tm + tc) + 4 * 4 * tm * tc


def _select_tiles(n: int, d_pad: int, budget: int, tc_cap: int):
    use = (budget * 3) // 4                       # leave headroom
    n128 = _round_up(n, 128)

    # Largest column tile within budget (bounded by d_pad so huge embedding
    # dims cannot blow VMEM), then split the padded columns as evenly as
    # possible over that many blocks to minimise padding waste.
    tc_budget = tc_cap
    while tc_budget > 256 and _vmem_estimate(256, tc_budget, d_pad) > use:
        tc_budget //= 2
    n_col_blocks = _cdiv(n128, tc_budget)
    tc = min(tc_budget, _round_up(_cdiv(n, n_col_blocks), 128))
    n_pad = n_col_blocks * tc

    # Row tile: largest MXU-friendly size that divides tc (hence divides
    # n_pad) and fits the budget.  tc >= 2*tm in the large-N configs keeps the
    # row-block count even so the 'parallel' axis shards onto both v7x TCs.
    tm = 128
    for cand in (512, 256):
        if tc % cand == 0 and _vmem_estimate(cand, tc, d_pad) <= use:
            tm = cand
            break
    return tm, tc, n_pad


def nt_xent_loss(z_i: jax.Array, z_j: jax.Array,
                 temperature: float = 0.1) -> jax.Array:
    """NT-Xent loss for world_size == 1 (GatherLayer all-gather is identity)."""
    # TODO(synk): world_size > 1 (torch.distributed all_gather via GatherLayer)
    # needs a cross-device gather outside this single-device kernel.
    assert z_i.shape == z_j.shape and z_i.ndim == 2

    z = jnp.concatenate([z_i, z_j], axis=0).astype(jnp.float32)   # (N, D)
    N, D = z.shape
    half = N // 2
    inv_temp = 1.0 / float(temperature)

    # Normalize once (rsqrt) and compute the positive logit in f32 here; both
    # fuse into one XLA elementwise pass, and the kernel no longer needs a
    # third (rolled) input stream or an epilogue reduce.
    sumsq = jnp.sum(z * z, axis=-1, keepdims=True)
    zn = z * lax.rsqrt(jnp.maximum(sumsq, jnp.float32(1e-16)))
    pos = jnp.sum(zn * jnp.roll(zn, -half, axis=0), axis=-1) * jnp.float32(inv_temp)

    if N <= 512:
        # Single-tile shapes: the Pallas launch/pipeline overhead dominates;
        # the dense f32 XLA path is faster and trivially fused.
        sim = (zn @ zn.T) * jnp.float32(inv_temp)
        sim = jnp.where(jnp.eye(N, dtype=bool), -jnp.inf, sim)
        lse = jax.scipy.special.logsumexp(sim, axis=-1)
        return jnp.sum(lse - pos) / jnp.float32(N)

    d_pad = _round_up(D, 128)                     # lane-dense contraction dim
    budget, tc_cap = _vmem_budget()
    tm, tc, n_pad = _select_tiles(N, d_pad, budget, tc_cap)
    # TODO(synk): for very large D (beyond ~2K with big tiles) add a K grid
    # axis with a (tm, tc) accumulator instead of relying on tc clamping alone.

    zn_bf = jnp.pad(zn, ((0, n_pad - N), (0, d_pad - D))).astype(jnp.bfloat16)

    grid = (n_pad // tm, n_pad // tc)
    kernel = functools.partial(
        _nt_xent_lse_kernel, inv_temp=inv_temp, n_valid=N, tm=tm, tc=tc,
        mask_padding=(n_pad != N))

    lse = pl.pallas_call(
        kernel,
        out_shape=jax.ShapeDtypeStruct((n_pad, 1), jnp.float32),
        grid_spec=pltpu.PrefetchScalarGridSpec(
            num_scalar_prefetch=0,
            grid=grid,
            in_specs=[
                pl.BlockSpec((tm, d_pad), lambda i, j: (i, 0)),   # row operand
                pl.BlockSpec((tc, d_pad), lambda i, j: (j, 0)),   # col operand (same array)
            ],
            out_specs=pl.BlockSpec((tm, 1), lambda i, j: (i, 0)),
            scratch_shapes=[pltpu.VMEM((tm, 1), jnp.float32),     # running max
                            pltpu.VMEM((tm, 1), jnp.float32)],    # running sum
        ),
        compiler_params=pltpu.CompilerParams(
            dimension_semantics=("parallel", "arbitrary"),
            vmem_limit_bytes=budget,
        ),
        cost_estimate=pl.CostEstimate(
            flops=2 * n_pad * n_pad * d_pad,
            transcendentals=n_pad * n_pad,
            # column operand is re-streamed once per row block
            bytes_accessed=(n_pad // tm) * n_pad * d_pad * 2
                           + n_pad * d_pad * 2 + n_pad * 4,
        ),
    )(zn_bf, zn_bf)

    return jnp.sum(lse[:N, 0] - pos) / jnp.float32(N)


def _nt_xent_reference(z_i, z_j, temperature=0.1):
    """Pure-JAX f32 reference mirroring the PyTorch module (world_size=1)."""
    z = jnp.concatenate([z_i, z_j], axis=0).astype(jnp.float32)
    N = z.shape[0]
    half = N // 2
    zn = z / jnp.maximum(jnp.linalg.norm(z, axis=-1, keepdims=True), 1e-8)
    sim = (zn @ zn.T) / temperature
    pair = (jnp.arange(N) + half) % N
    pos = sim[jnp.arange(N), pair]
    masked = jnp.where(jnp.eye(N, dtype=bool), -jnp.inf, sim)
    lse = jax.scipy.special.logsumexp(masked, axis=-1)
    return jnp.sum(lse - pos) / N


if __name__ == "__main__":
    temperature = 0.1

    def _check(batch, dim, seed):
        k_i, k_j = jax.random.split(jax.random.PRNGKey(seed))
        zi = jax.random.normal(k_i, (batch, dim), dtype=jnp.float32)
        zj = jax.random.normal(k_j, (batch, dim), dtype=jnp.float32)
        loss = nt_xent_loss(zi, zj, temperature)
        jax.block_until_ready(loss)
        ref = _nt_xent_reference(zi, zj, temperature)
        assert jnp.allclose(loss, ref, rtol=2e-2, atol=2e-2), (batch, dim, loss, ref)

    # Small shape consistent with the module (batch_size=4, D=32): dense fallback.
    _check(4, 32, 0)
    # Moderate shape: Pallas path, several row blocks + padded columns (N=600).
    _check(300, 64, 1)
    # Larger shape: Pallas path with multiple column blocks, exercising the
    # online-logsumexp accumulation across the 'arbitrary' axis (N=2200).
    _check(1100, 64, 2)

    print("KERNEL_OK")
</pallas_src>

<mosaic_0001>
module attributes {stable_mosaic.version = 11 : i64} {
  func.func @_nt_xent_lse_kernel(%arg0: i32, %arg1: i32, %arg2: memref<128x128xbf16, #tpu.memory_space<vmem>>, %arg3: memref<640x128xbf16, #tpu.memory_space<vmem>>, %arg4: memref<128x1xf32, #tpu.memory_space<vmem>>, %arg5: memref<128x1xf32, #tpu.memory_space<vmem>>, %arg6: memref<128x1xf32, #tpu.memory_space<vmem>>) attributes {dimension_semantics = [#tpu.dimension_semantics<parallel>, #tpu.dimension_semantics<arbitrary>], iteration_bounds = array<i64: 5, 1>, scalar_prefetch = 0 : i64, scratch_operands = 2 : i64, tpu.core_type = #tpu.core_type<tc>, window_params = [{transform_indices = @transform_0, window_bounds = array<i64: 128, 128>}, {transform_indices = @transform_1, window_bounds = array<i64: 640, 128>}, {transform_indices = @transform_2, window_bounds = array<i64: 128, 1>}]} {
    %c0_i32 = arith.constant 0 : i32
    %0 = arith.cmpi eq, %arg1, %c0_i32 : i32
    %1 = arith.extui %0 : i1 to i32
    %c0_i32_0 = arith.constant 0 : i32
    %2 = arith.cmpi ne, %1, %c0_i32_0 : i32
    scf.if %2 {
      %cst_19 = arith.constant -1.000000e+30 : f32
      %42 = vector.broadcast %cst_19 : f32 to vector<128x1xf32>
      %c0_20 = arith.constant 0 : index
      %c0_21 = arith.constant 0 : index
      %43 = vector.load %arg5[%c0_20, %c0_21] : memref<128x1xf32, #tpu.memory_space<vmem>>, vector<128x1xf32>
      tpu.vector_store %arg5[%c0_20, %c0_21], %42 {strides = array<i32>} : memref<128x1xf32, #tpu.memory_space<vmem>>, vector<128x1xf32>,
      %cst_22 = arith.constant 0.000000e+00 : f32
      %44 = vector.broadcast %cst_22 : f32 to vector<128x1xf32>
      %c0_23 = arith.constant 0 : index
      %c0_24 = arith.constant 0 : index
      %45 = vector.load %arg6[%c0_23, %c0_24] : memref<128x1xf32, #tpu.memory_space<vmem>>, vector<128x1xf32>
      tpu.vector_store %arg6[%c0_23, %c0_24], %44 {strides = array<i32>} : memref<128x1xf32, #tpu.memory_space<vmem>>, vector<128x1xf32>,
    } else {
    }
    %c0 = arith.constant 0 : index
    %c0_1 = arith.constant 0 : index
    %3 = vector.load %arg2[%c0, %c0_1] : memref<128x128xbf16, #tpu.memory_space<vmem>>, vector<128x128xbf16>
    %c0_2 = arith.constant 0 : index
    %c0_3 = arith.constant 0 : index
    %4 = vector.load %arg3[%c0_2, %c0_3] : memref<640x128xbf16, #tpu.memory_space<vmem>>, vector<640x128xbf16>
    %cst = arith.constant dense<0.000000e+00> : vector<128x640xf32>
    %5 = tpu.matmul %3, %4, %cst {dimension_numbers = #tpu.dot_dimension_numbers<[1], [1], [0], [0], [0, 0, 1, 0], [], []>} : vector<128x128xbf16>, vector<640x128xbf16>, vector<128x640xf32> -> vector<128x640xf32>
    %cst_4 = arith.constant 1.000000e+01 : f32
    %6 = vector.broadcast %cst_4 : f32 to vector<128x640xf32>
    %7 = arith.mulf %5, %6 : vector<128x640xf32>
    %8 = tpu.iota {dimensions = array<i32: 0>} : vector<128x640xi32>
    %9 = tpu.iota {dimensions = array<i32: 1>} : vector<128x640xi32>
    %10 = arith.subi %9, %8 : vector<128x640xi32>
    %c128_i32 = arith.constant 128 : i32
    %11 = arith.muli %arg0, %c128_i32 : i32
    %c640_i32 = arith.constant 640 : i32
    %12 = arith.muli %arg1, %c640_i32 : i32
    %13 = arith.subi %11, %12 : i32
    %14 = vector.broadcast %13 : i32 to vector<128x640xi32>
    %15 = arith.cmpi eq, %10, %14 : vector<128x640xi32>
    %c640_i32_5 = arith.constant 640 : i32
    %16 = arith.muli %arg1, %c640_i32_5 : i32
    %c600_i32 = arith.constant 600 : i32
    %17 = arith.subi %c600_i32, %16 : i32
    %18 = vector.broadcast %17 : i32 to vector<128x640xi32>
    %19 = arith.cmpi sge, %9, %18 : vector<128x640xi32>
    %20 = arith.ori %15, %19 : vector<128x640xi1>
    %cst_6 = arith.constant -1.000000e+30 : f32
    %21 = vector.broadcast %cst_6 : f32 to vector<128x640xf32>
    %22 = arith.select %20, %21, %7 : vector<128x640xi1>, vector<128x640xf32>
    %c0_7 = arith.constant 0 : index
    %c0_8 = arith.constant 0 : index
    %23 = vector.load %arg5[%c0_7, %c0_8] : memref<128x1xf32, #tpu.memory_space<vmem>>, vector<128x1xf32>
    %cst_9 = arith.constant dense<0xFF800000> : vector<128xf32>
    %24 = vector.multi_reduction <maximumf>, %22, %cst_9 [1] : vector<128x640xf32> to vector<128xf32>
    %25 = vector.shape_cast %24 : vector<128xf32> to vector<128x1xf32>
    %26 = arith.maximumf %23, %25 : vector<128x1xf32>
    %27 = arith.subf %23, %26 : vector<128x1xf32>
    %28 = math.exp %27 : vector<128x1xf32>
    %c0_10 = arith.constant 0 : index
    %c0_11 = arith.constant 0 : index
    %29 = vector.load %arg6[%c0_10, %c0_11] : memref<128x1xf32, #tpu.memory_space<vmem>>, vector<128x1xf32>
    %30 = arith.mulf %28, %29 : vector<128x1xf32>
    %31 = vector.broadcast %26 : vector<128x1xf32> to vector<128x640xf32>
    %32 = arith.subf %22, %31 : vector<128x640xf32>
    %33 = math.exp %32 : vector<128x640xf32>
    %cst_12 = arith.constant dense<0.000000e+00> : vector<128xf32>
    %34 = vector.multi_reduction <add>, %33, %cst_12 [1] : vector<128x640xf32> to vector<128xf32>
    %35 = vector.shape_cast %34 : vector<128xf32> to vector<128x1xf32>
    %36 = arith.addf %30, %35 : vector<128x1xf32>
    %c0_13 = arith.constant 0 : index
    %c0_14 = arith.constant 0 : index
    %37 = vector.load %arg6[%c0_13, %c0_14] : memref<128x1xf32, #tpu.memory_space<vmem>>, vector<128x1xf32>
    tpu.vector_store %arg6[%c0_13, %c0_14], %36 {strides = array<i32>} : memref<128x1xf32, #tpu.memory_space<vmem>>, vector<128x1xf32>,
    %c0_15 = arith.constant 0 : index
    %c0_16 = arith.constant 0 : index
    %38 = vector.load %arg5[%c0_15, %c0_16] : memref<128x1xf32, #tpu.memory_space<vmem>>, vector<128x1xf32>
    tpu.vector_store %arg5[%c0_15, %c0_16], %26 {strides = array<i32>} : memref<128x1xf32, #tpu.memory_space<vmem>>, vector<128x1xf32>,
    %c0_i32_17 = arith.constant 0 : i32
    %39 = arith.cmpi eq, %arg1, %c0_i32_17 : i32
    %40 = arith.extui %39 : i1 to i32
    %c0_i32_18 = arith.constant 0 : i32
    %41 = arith.cmpi ne, %40, %c0_i32_18 : i32
    scf.if %41 {
      %c0_19 = arith.constant 0 : index
      %c0_20 = arith.constant 0 : index
      %42 = vector.load %arg5[%c0_19, %c0_20] : memref<128x1xf32, #tpu.memory_space<vmem>>, vector<128x1xf32>
      %c0_21 = arith.constant 0 : index
      %c0_22 = arith.constant 0 : index
      %43 = vector.load %arg6[%c0_21, %c0_22] : memref<128x1xf32, #tpu.memory_space<vmem>>, vector<128x1xf32>
      %44 = math.log %43 : vector<128x1xf32>
      %45 = arith.addf %42, %44 : vector<128x1xf32>
      %c0_23 = arith.constant 0 : index
      %c0_24 = arith.constant 0 : index
      %46 = vector.load %arg4[%c0_23, %c0_24] : memref<128x1xf32, #tpu.memory_space<vmem>>, vector<128x1xf32>
      tpu.vector_store %arg4[%c0_23, %c0_24], %45 {strides = array<i32>} : memref<128x1xf32, #tpu.memory_space<vmem>>, vector<128x1xf32>,
    } else {
    }
    return
  }
  func.func @transform_0(%arg0: i32, %arg1: i32) -> (i32, i32) {
    %c0_i32 = arith.constant 0 : i32
    %c0_i32_0 = arith.constant 0 : i32
    return %arg0, %c0_i32 : i32, i32
  }
  func.func @transform_1(%arg0: i32, %arg1: i32) -> (i32, i32) {
    %c0_i32 = arith.constant 0 : i32
    %c0_i32_0 = arith.constant 0 : i32
    return %arg1, %c0_i32 : i32, i32
  }
  func.func @transform_2(%arg0: i32, %arg1: i32) -> (i32, i32) {
    %c0_i32 = arith.constant 0 : i32
    %c0_i32_0 = arith.constant 0 : i32
    return %arg0, %c0_i32 : i32, i32
  }
}

</mosaic_0001>

<llo_original>
// kernel: tpu_custom_call.1
$region0: #{tpu_custom_call.1}
  #allocation0 [shape = 'u32[]', space=smem, size = 0x4, offset = 0x4, fixed_abs, tag = 'smem constant byte address 0x4 - core index']
  #allocation1 [shape = 'u32[144,128]{1,0:T(1,128)}', space=vmem, size = 0x12000, scoped, tag = 'internal scratch']
  #allocation2 [shape = 'f32[128,1]{1,0:T(8,128)}', space=vmem, size = 0x10000, scoped, tag = 'scratch operand']
  #allocation3 [shape = 'f32[128,1]{1,0:T(8,128)}', space=vmem, size = 0x10000, scoped, tag = 'scratch operand']
  %s0 = inlined_call_operand.hbm [shape: bf16[640,128], index: 0, kind: input, shape index: {}]
  %s1 = inlined_call_operand.hbm [shape: bf16[640,128], index: 1, kind: input, shape index: {}]
  %s2 = inlined_call_operand.vmem [shape: f32[640,1], index: 2, kind: output, shape index: {}]
  %s3 = sld [smem:[#allocation0]]
  $region57: #{tpu_custom_call.1} parent=0
    _
  %s5 = ssub.s32 1, %s3
  %s6 = scalar_select 0, %s5, %s3
  $region1: #{tpu_custom_call.1} parent=0
    #allocation4 [shape = 'u8[65536]{0}', space=vmem, size = 0x10000, scoped, tag = 'input window, operand 0']
    #allocation5 [shape = 's32[2]{0}', space=sflag, size = 0x8, scoped, tag = 'scoped memory for tpu_custom_call.1']
    #allocation6 [shape = 'u8[163840]{0}', space=vmem, size = 0x28000, scoped, tag = 'input window, operand 1, single buffered']
    #allocation7 [shape = 's32[1]{0}', space=sflag, size = 0x4, scoped, tag = 'scoped memory for tpu_custom_call.1']
    %7 = vsyncpa [#allocation5], 0
    %s8 = scalar_lea.sflag [#allocation5], 1
    %9 = vsyncpa %s8, 0
    %10 = vsyncpa [#allocation7], 0
    loop: start=0, step=1, limit=7
    $region2: #{tpu_custom_call.1} parent=1 // loop_pre_header
      _
    $region3: #{tpu_custom_call.1} parent=1 // loop_header
      %s12 = sphi 0, %s16
      %p13 = scmp.ge.s32.totalorder %s12, 7
      %s19 = sphi 0, %s31
      %s20 = sphi 0, %s27
      %s21 = sphi 0, %s19
      %s22 = sphi 0, %s20
      %s23 = sphi 0, %s21
      %s24 = sphi 0, %s22
      %s34 = sphi 0, %s36
      %s37 = sphi 0, %s34
      %s38 = sphi 0, %s37
      %s54 = sphi 0, %s38
      %s60 = sphi 0, %s62
      %s63 = sphi 0, %s60
      %s64 = sphi 0, %s63
      %s80 = sphi 0, %s64
      %s86 = sphi 0, %s88
      %s89 = sphi 0, %s86
      %s90 = sphi 0, %s89
      %s106 = sphi 0, %s90
    $region4: #{tpu_custom_call.1} parent=1 // loop_header_branch
      %15 = sbr.rel (%p13) target = $region8
    $region5: #{tpu_custom_call.1} parent=1 // loop_body
      %s17 = ssub.s32 %s12, 1
      %s18 = ssub.s32 %s12, 2
      %s25 = sadd.s32 1, %s20
      %p26 = scmp.ge.s32.totalorder %s25, 1
      %s27 = scalar_select %p26, 0, %s25
      %s28 = sadd.s32 1, %s19
      %s29 = scalar_select %p26, %s28, %s19
      %p30 = scmp.ge.s32.totalorder %s29, 5
      %s31 = scalar_select %p30, 0, %s29
      %s32 = ssub.s32 %s19, %s31
      %p33 = scmp.eq.s32.totalorder %s32, 0
      %s35 = sadd.s32 %s34, 1
      %s36 = scalar_select %p33, %s34, %s35
      %p39 = pneg %p33
      %p40 = scmp.eq.s32.totalorder %s12, 4
      %p41 = por %p39, %p40
      %p42 = scmp.ne.s32.totalorder %s34, %s37
      %p43 = scmp.eq.s32.totalorder %s12, 0
      %p44 = por %p42, %p43
      %p45 = scmp.ne.s32.totalorder %s34, %s37
      %p46 = scmp.eq.s32.totalorder %s17, 4
      %p47 = por %p45, %p46
      %p48 = scmp.ne.s32.totalorder %s37, %s38
      %p49 = scmp.eq.s32.totalorder %s17, 0
      %p50 = por %p48, %p49
      %p51 = scmp.ne.s32.totalorder %s37, %s38
      %p52 = scmp.eq.s32.totalorder %s18, 4
      %p53 = por %p51, %p52
      %p55 = scmp.ne.s32.totalorder %s38, %s54
      %p56 = scmp.eq.s32.totalorder %s18, 0
      %p57 = por %p55, %p56
      %s58 = ssub.s32 %s20, %s27
      %p59 = scmp.eq.s32.totalorder %s58, 0
      %s61 = sadd.s32 %s60, 1
      %s62 = scalar_select %p59, %s60, %s61
      %p65 = pneg %p59
      %p66 = scmp.eq.s32.totalorder %s12, 4
      %p67 = por %p65, %p66
      %p68 = scmp.ne.s32.totalorder %s60, %s63
      %p69 = scmp.eq.s32.totalorder %s12, 0
      %p70 = por %p68, %p69
      %p71 = scmp.ne.s32.totalorder %s60, %s63
      %p72 = scmp.eq.s32.totalorder %s17, 4
      %p73 = por %p71, %p72
      %p74 = scmp.ne.s32.totalorder %s63, %s64
      %p75 = scmp.eq.s32.totalorder %s17, 0
      %p76 = por %p74, %p75
      %p77 = scmp.ne.s32.totalorder %s63, %s64
      %p78 = scmp.eq.s32.totalorder %s18, 4
      %p79 = por %p77, %p78
      %p81 = scmp.ne.s32.totalorder %s64, %s80
      %p82 = scmp.eq.s32.totalorder %s18, 0
      %p83 = por %p81, %p82
      %s84 = ssub.s32 %s19, %s31
      %p85 = scmp.eq.s32.totalorder %s84, 0
      %s87 = sadd.s32 %s86, 1
      %s88 = scalar_select %p85, %s86, %s87
      %p91 = pneg %p85
      %p92 = scmp.eq.s32.totalorder %s12, 4
      %p93 = por %p91, %p92
      %p94 = scmp.ne.s32.totalorder %s86, %s89
      %p95 = scmp.eq.s32.totalorder %s12, 0
      %p96 = por %p94, %p95
      %p97 = scmp.ne.s32.totalorder %s86, %s89
      %p98 = scmp.eq.s32.totalorder %s17, 4
      %p99 = por %p97, %p98
      %p100 = scmp.ne.s32.totalorder %s89, %s90
      %p101 = scmp.eq.s32.totalorder %s17, 0
      %p102 = por %p100, %p101
      %p103 = scmp.ne.s32.totalorder %s89, %s90
      %p104 = scmp.eq.s32.totalorder %s18, 4
      %p105 = por %p103, %p104
      %p107 = scmp.ne.s32.totalorder %s90, %s106
      %p108 = scmp.eq.s32.totalorder %s18, 0
      %p109 = por %p107, %p108
      %p110 = scmp.le.s32.totalorder 1, %s12
      %p111 = scmp.lt.s32.totalorder %s12, 6
      %p112 = pnand %p110, %p111
      %p113 = pneg %p112
      // Predicated region
      $region9: #{tpu_custom_call.1} parent=5 // pred_check
        _
      $region10: #{tpu_custom_call.1} parent=5 // pred_check_branch
        %115 = sbr.rel (%p112) target = $region12
      $region11: #{tpu_custom_call.1} parent=5 // pred_region
        %s116 = ssub.s32 %s12, 1
        // Predicated region
        $region13: #{tpu_custom_call.1} parent=11 // pred_check
          %p117 = pneg %p76
        $region14: #{tpu_custom_call.1} parent=11 // pred_check_branch
          %119 = sbr.rel (%p117) target = $region16
        $region15: #{tpu_custom_call.1} parent=11 // pred_region
          %s120 = smul.u32 80, %s22
          %s122 = ssub.s32 5120, 5120
          %123 = vsyncadd [#allocation7], %s122
          %s124 = smul.addr %s120, 64
          %s125 = scalar_lea.hbm %s1, %s124
          %s126 = sshll.u32 [#allocation6], 4
          %s127 = int_to_ptr.vmem [resolvable:$true] %s126
          %132 = dma.hbm_to_vmem [thread:$0]  %s125, 5120, %s127, [#allocation7], 64, 64, 4
        $region16: #{tpu_custom_call.1} parent=11 // pred_fallthru
          _
      $region12: #{tpu_custom_call.1} parent=5 // pred_fallthru
        _
      %p133 = scmp.lt.s32.totalorder %s12, 5
      // Predicated region
      $region17: #{tpu_custom_call.1} parent=5 // pred_check
        %p134 = pneg %p133
      $region18: #{tpu_custom_call.1} parent=5 // pred_check_branch
        %136 = sbr.rel (%p134) target = $region20
      $region19: #{tpu_custom_call.1} parent=5 // pred_region
        // Predicated region
        $region21: #{tpu_custom_call.1} parent=19 // pred_check
          %p137 = pneg %p44
        $region22: #{tpu_custom_call.1} parent=19 // pred_check_branch
          %139 = sbr.rel (%p137) target = $region24
        $region23: #{tpu_custom_call.1} parent=19 // pred_region
          %s140 = sand.u32 %s34, 1
          %s141 = scalar_lea.sflag [#allocation5], %s140
          %s142 = sand.u32 %s34, 1
          %s143 = smul.addr %s142, 64
          %s144 = scalar_lea.vmem [#allocation4], %s143
          %s145 = smul.u32 16, %s19
          %s147 = ssub.s32 1024, 1024
          %148 = vsyncadd %s141, %s147
          %s149 = smul.addr %s145, 64
          %s150 = scalar_lea.hbm %s0, %s149
          %s151 = sshll.u32 %s144, 4
          %s152 = int_to_ptr.vmem [resolvable:$true] %s151
          %157 = dma.hbm_to_vmem [thread:$0]  %s150, 1024, %s152, %s141, 64, 64, 4
        $region24: #{tpu_custom_call.1} parent=19 // pred_fallthru
          _
      $region20: #{tpu_custom_call.1} parent=5 // pred_fallthru
        _
      %p158 = scmp.le.s32.totalorder 1, %s12
      %p159 = scmp.lt.s32.totalorder %s12, 6
      %p160 = pnand %p158, %p159
      %p161 = pneg %p160
      // Predicated region
      $region25: #{tpu_custom_call.1} parent=5 // pred_check
        _
      $region26: #{tpu_custom_call.1} parent=5 // pred_check_branch
        %163 = sbr.rel (%p160) target = $region28
      $region27: #{tpu_custom_call.1} parent=5 // pred_region
        %s164 = ssub.s32 %s12, 1
        %s165 = sand.u32 %s37, 1
        %s166 = scalar_lea.sflag [#allocation5], %s165
        %s167 = sand.u32 %s37, 1
        %s168 = smul.addr %s167, 64
        %s169 = scalar_lea.vmem [#allocation4], %s168
        // Predicated region
        $region29: #{tpu_custom_call.1} parent=27 // pred_check
          %p170 = pneg %p50
        $region30: #{tpu_custom_call.1} parent=27 // pred_check_branch
          %172 = sbr.rel (%p170) target = $region32
        $region31: #{tpu_custom_call.1} parent=27 // pred_region
          %173 = dma.done %s166, 1024
        $region32: #{tpu_custom_call.1} parent=27 // pred_fallthru
          _
        // Predicated region
        $region33: #{tpu_custom_call.1} parent=27 // pred_check
          %p174 = pneg %p76
        $region34: #{tpu_custom_call.1} parent=27 // pred_check_branch
          %176 = sbr.rel (%p174) target = $region36
        $region35: #{tpu_custom_call.1} parent=27 // pred_region
          %177 = dma.done [#allocation7], 5120
        $region36: #{tpu_custom_call.1} parent=27 // pred_fallthru
          _
        %s178 = sand.u32 %s37, 1
        %s179 = scalar_lea.sflag [#allocation5], %s178
        %s180 = sand.u32 %s37, 1
        %s181 = smul.addr %s180, 64
        %s182 = scalar_lea.vmem [#allocation4], %s181
        %p183 = pneg %p50
        %p184 = pneg %p47
        %p185 = pneg %p76
        %p186 = pneg %p73
        %p187 = pneg %p102
        %p188 = pneg %p99
        %s189 = smul.u32 16, %s21
        %p190 = scmp.lt.s32.totalorder %s189, 79
        %s191 = scalar_select %p190, %s189, 79
        %s192 = smul.addr %s191, 8
        %s193 = scalar_lea.vmem %s2, %s192
        %s194 = smul.u32 16, %s21
        %s195 = smul.u32 80, %s22
        %s196 = smul.u32 16, %s21
        %p197 = scmp.lt.s32.totalorder %s196, 79
        %s198 = scalar_select %p197, %s196, 79
        %s199 = smul.addr %s198, 8
        %s200 = scalar_lea.vmem %s2, %s199
        %s201 = smul.u32 16, %s21
        %p203 = scmp.eq.s32.totalorder %s22, 0
        // Predicated region
        $region37: #{tpu_custom_call.1} parent=27 // pred_check
          %p204 = pneg %p203
        $region38: #{tpu_custom_call.1} parent=27 // pred_check_branch
          %206 = sbr.rel (%p204) target = $region40
        $region39: #{tpu_custom_call.1} parent=27 // pred_region
          %vm207 = vcmask 7168
          %208 = vst.msk [vmem:[#allocation2] sm:$0xff] %vm207, -1e+30
          %209 = vst.msk [vmem:[#allocation2 + $0x8] sm:$0xff] %vm207, -1e+30
          %210 = vst.msk [vmem:[#allocation2 + $0x10] sm:$0xff] %vm207, -1e+30
          %211 = vst.msk [vmem:[#allocation2 + $0x18] sm:$0xff] %vm207, -1e+30
          %212 = vst.msk [vmem:[#allocation2 + $0x20] sm:$0xff] %vm207, -1e+30
          %213 = vst.msk [vmem:[#allocation2 + $0x28] sm:$0xff] %vm207, -1e+30
          %214 = vst.msk [vmem:[#allocation2 + $0x30] sm:$0xff] %vm207, -1e+30
          %215 = vst.msk [vmem:[#allocation2 + $0x38] sm:$0xff] %vm207, -1e+30
          %216 = vst.msk [vmem:[#allocation2 + $0x40] sm:$0xff] %vm207, -1e+30
          %217 = vst.msk [vmem:[#allocation2 + $0x48] sm:$0xff] %vm207, -1e+30
          %218 = vst.msk [vmem:[#allocation2 + $0x50] sm:$0xff] %vm207, -1e+30
          %219 = vst.msk [vmem:[#allocation2 + $0x58] sm:$0xff] %vm207, -1e+30
          %220 = vst.msk [vmem:[#allocation2 + $0x60] sm:$0xff] %vm207, -1e+30
          %221 = vst.msk [vmem:[#allocation2 + $0x68] sm:$0xff] %vm207, -1e+30
          %222 = vst.msk [vmem:[#allocation2 + $0x70] sm:$0xff] %vm207, -1e+30
          %223 = vst.msk [vmem:[#allocation2 + $0x78] sm:$0xff] %vm207, -1e+30
          %224 = vst.msk [vmem:[#allocation3] sm:$0xff] %vm207, 0.0
          %225 = vst.msk [vmem:[#allocation3 + $0x8] sm:$0xff] %vm207, 0.0
          %226 = vst.msk [vmem:[#allocation3 + $0x10] sm:$0xff] %vm207, 0.0
          %227 = vst.msk [vmem:[#allocation3 + $0x18] sm:$0xff] %vm207, 0.0
          %228 = vst.msk [vmem:[#allocation3 + $0x20] sm:$0xff] %vm207, 0.0
          %229 = vst.msk [vmem:[#allocation3 + $0x28] sm:$0xff] %vm207, 0.0
          %230 = vst.msk [vmem:[#allocation3 + $0x30] sm:$0xff] %vm207, 0.0
          %231 = vst.msk [vmem:[#allocation3 + $0x38] sm:$0xff] %vm207, 0.0
          %232 = vst.msk [vmem:[#allocation3 + $0x40] sm:$0xff] %vm207, 0.0
          %233 = vst.msk [vmem:[#allocation3 + $0x48] sm:$0xff] %vm207, 0.0
          %234 = vst.msk [vmem:[#allocation3 + $0x50] sm:$0xff] %vm207, 0.0
          %235 = vst.msk [vmem:[#allocation3 + $0x58] sm:$0xff] %vm207, 0.0
          %236 = vst.msk [vmem:[#allocation3 + $0x60] sm:$0xff] %vm207, 0.0
          %237 = vst.msk [vmem:[#allocation3 + $0x68] sm:$0xff] %vm207, 0.0
          %238 = vst.msk [vmem:[#allocation3 + $0x70] sm:$0xff] %vm207, 0.0
          %239 = vst.msk [vmem:[#allocation3 + $0x78] sm:$0xff] %vm207, 0.0
        $region40: #{tpu_custom_call.1} parent=27 // pred_fallthru
          _
        %v240 = vld [vmem:[%s169] sm:$0xf]
        %v241 = vld [vmem:[%s169 + $0x4] sm:$0xf]
        %v242 = vld [vmem:[%s169 + $0x8] sm:$0xf]
        %v243 = vld [vmem:[%s169 + $0xc] sm:$0xf]
        %v244 = vld [vmem:[%s169 + $0x10] sm:$0xf]
        %v245 = vld [vmem:[%s169 + $0x14] sm:$0xf]
        %v246 = vld [vmem:[%s169 + $0x18] sm:$0xf]
        %v247 = vld [vmem:[%s169 + $0x1c] sm:$0xf]
        %v248 = vld [vmem:[%s169 + $0x20] sm:$0xf]
        %v249 = vld [vmem:[%s169 + $0x24] sm:$0xf]
        %v250 = vld [vmem:[%s169 + $0x28] sm:$0xf]
        %v251 = vld [vmem:[%s169 + $0x2c] sm:$0xf]
        %v252 = vld [vmem:[%s169 + $0x30] sm:$0xf]
        %v253 = vld [vmem:[%s169 + $0x34] sm:$0xf]
        %v254 = vld [vmem:[%s169 + $0x38] sm:$0xf]
        %v255 = vld [vmem:[%s169 + $0x3c] sm:$0xf]
        %v256 = vld [vmem:[#allocation6] sm:$0xf]
        %v257 = vld [vmem:[#allocation6 + $0x4] sm:$0xf]
        %v258 = vld [vmem:[#allocation6 + $0x8] sm:$0xf]
        %v259 = vld [vmem:[#allocation6 + $0xc] sm:$0xf]
        %v260 = vld [vmem:[#allocation6 + $0x10] sm:$0xf]
        %v261 = vld [vmem:[#allocation6 + $0x14] sm:$0xf]
        %v262 = vld [vmem:[#allocation6 + $0x18] sm:$0xf]
        %v263 = vld [vmem:[#allocation6 + $0x1c] sm:$0xf]
        %v264 = vld [vmem:[#allocation6 + $0x20] sm:$0xf]
        %v265 = vld [vmem:[#allocation6 + $0x24] sm:$0xf]
        %v266 = vld [vmem:[#allocation6 + $0x28] sm:$0xf]
        %v267 = vld [vmem:[#allocation6 + $0x2c] sm:$0xf]
        %v268 = vld [vmem:[#allocation6 + $0x30] sm:$0xf]
        %v269 = vld [vmem:[#allocation6 + $0x34] sm:$0xf]
        %v270 = vld [vmem:[#allocation6 + $0x38] sm:$0xf]
        %v271 = vld [vmem:[#allocation6 + $0x3c] sm:$0xf]
        %v272 = vld [vmem:[#allocation6 + $0x40] sm:$0xf]
        %v273 = vld [vmem:[#allocation6 + $0x44] sm:$0xf]
        %v274 = vld [vmem:[#allocation6 + $0x48] sm:$0xf]
        %v275 = vld [vmem:[#allocation6 + $0x4c] sm:$0xf]
        %v276 = vld [vmem:[#allocation6 + $0x50] sm:$0xf]
        %v277 = vld [vmem:[#allocation6 + $0x54] sm:$0xf]
        %v278 = vld [vmem:[#allocation6 + $0x58] sm:$0xf]
        %v279 = vld [vmem:[#allocation6 + $0x5c] sm:$0xf]
        %v280 = vld [vmem:[#allocation6 + $0x60] sm:$0xf]
        %v281 = vld [vmem:[#allocation6 + $0x64] sm:$0xf]
        %v282 = vld [vmem:[#allocation6 + $0x68] sm:$0xf]
        %v283 = vld [vmem:[#allocation6 + $0x6c] sm:$0xf]
        %v284 = vld [vmem:[#allocation6 + $0x70] sm:$0xf]
        %v285 = vld [vmem:[#allocation6 + $0x74] sm:$0xf]
        %v286 = vld [vmem:[#allocation6 + $0x78] sm:$0xf]
        %v287 = vld [vmem:[#allocation6 + $0x7c] sm:$0xf]
        %v288 = vld [vmem:[#allocation6 + $0x80] sm:$0xf]
        %v289 = vld [vmem:[#allocation6 + $0x84] sm:$0xf]
        %v290 = vld [vmem:[#allocation6 + $0x88] sm:$0xf]
        %v291 = vld [vmem:[#allocation6 + $0x8c] sm:$0xf]
        %v292 = vld [vmem:[#allocation6 + $0x90] sm:$0xf]
        %v293 = vld [vmem:[#allocation6 + $0x94] sm:$0xf]
        %v294 = vld [vmem:[#allocation6 + $0x98] sm:$0xf]
        %v295 = vld [vmem:[#allocation6 + $0x9c] sm:$0xf]
        %v296 = vld [vmem:[#allocation6 + $0xa0] sm:$0xf]
        %v297 = vld [vmem:[#allocation6 + $0xa4] sm:$0xf]
        %v298 = vld [vmem:[#allocation6 + $0xa8] sm:$0xf]
        %v299 = vld [vmem:[#allocation6 + $0xac] sm:$0xf]
        %v300 = vld [vmem:[#allocation6 + $0xb0] sm:$0xf]
        %v301 = vld [vmem:[#allocation6 + $0xb4] sm:$0xf]
        %v302 = vld [vmem:[#allocation6 + $0xb8] sm:$0xf]
        %v303 = vld [vmem:[#allocation6 + $0xbc] sm:$0xf]
        %v304 = vld [vmem:[#allocation6 + $0xc0] sm:$0xf]
        %v305 = vld [vmem:[#allocation6 + $0xc4] sm:$0xf]
        %v306 = vld [vmem:[#allocation6 + $0xc8] sm:$0xf]
        %v307 = vld [vmem:[#allocation6 + $0xcc] sm:$0xf]
        %v308 = vld [vmem:[#allocation6 + $0xd0] sm:$0xf]
        %v309 = vld [vmem:[#allocation6 + $0xd4] sm:$0xf]
        %v310 = vld [vmem:[#allocation6 + $0xd8] sm:$0xf]
        %v311 = vld [vmem:[#allocation6 + $0xdc] sm:$0xf]
        %v312 = vld [vmem:[#allocation6 + $0xe0] sm:$0xf]
        %v313 = vld [vmem:[#allocation6 + $0xe4] sm:$0xf]
        %v314 = vld [vmem:[#allocation6 + $0xe8] sm:$0xf]
        %v315 = vld [vmem:[#allocation6 + $0xec] sm:$0xf]
        %v316 = vld [vmem:[#allocation6 + $0xf0] sm:$0xf]
        %v317 = vld [vmem:[#allocation6 + $0xf4] sm:$0xf]
        %v318 = vld [vmem:[#allocation6 + $0xf8] sm:$0xf]
        %v319 = vld [vmem:[#allocation6 + $0xfc] sm:$0xf]
        %v320 = vld [vmem:[#allocation6 + $0x100] sm:$0xf]
        %v321 = vld [vmem:[#allocation6 + $0x104] sm:$0xf]
        %v322 = vld [vmem:[#allocation6 + $0x108] sm:$0xf]
        %v323 = vld [vmem:[#allocation6 + $0x10c] sm:$0xf]
        %v324 = vld [vmem:[#allocation6 + $0x110] sm:$0xf]
        %v325 = vld [vmem:[#allocation6 + $0x114] sm:$0xf]
        %v326 = vld [vmem:[#allocation6 + $0x118] sm:$0xf]
        %v327 = vld [vmem:[#allocation6 + $0x11c] sm:$0xf]
        %v328 = vld [vmem:[#allocation6 + $0x120] sm:$0xf]
        %v329 = vld [vmem:[#allocation6 + $0x124] sm:$0xf]
        %v330 = vld [vmem:[#allocation6 + $0x128] sm:$0xf]
        %v331 = vld [vmem:[#allocation6 + $0x12c] sm:$0xf]
        %v332 = vld [vmem:[#allocation6 + $0x130] sm:$0xf]
        %v333 = vld [vmem:[#allocation6 + $0x134] sm:$0xf]
        %v334 = vld [vmem:[#allocation6 + $0x138] sm:$0xf]
        %v335 = vld [vmem:[#allocation6 + $0x13c] sm:$0xf]
        %v352 = vunpack.c.l.b16 %v240
        %v353 = vunpack.c.l.b16 %v241
        %v354 = vunpack.c.l.b16 %v242
        %v355 = vunpack.c.l.b16 %v243
        %v356 = vunpack.c.l.b16 %v244
        %v357 = vunpack.c.l.b16 %v245
        %v358 = vunpack.c.l.b16 %v246
        %v359 = vunpack.c.l.b16 %v247
        %v360 = vunpack.c.l.b16 %v248
        %v361 = vunpack.c.l.b16 %v249
        %v362 = vunpack.c.l.b16 %v250
        %v363 = vunpack.c.l.b16 %v251
        %v364 = vunpack.c.l.b16 %v252
        %v365 = vunpack.c.l.b16 %v253
        %v366 = vunpack.c.l.b16 %v254
        %v367 = vunpack.c.l.b16 %v255
        %v368 = vpack.c.b16 %v353, %v352
        %v369 = vpack.c.b16 %v355, %v354
        %v370 = vpack.c.b16 %v357, %v356
        %v371 = vpack.c.b16 %v359, %v358
        %v372 = vpack.c.b16 %v361, %v360
        %v373 = vpack.c.b16 %v363, %v362
        %v374 = vpack.c.b16 %v365, %v364
        %v375 = vpack.c.b16 %v367, %v366
        %v464 = vunpack.c.l.b16 %v256
        %v465 = vunpack.c.l.b16 %v257
        %v466 = vunpack.c.l.b16 %v258
        %v467 = vunpack.c.l.b16 %v259
        %v468 = vunpack.c.l.b16 %v260
        %v469 = vunpack.c.l.b16 %v261
        %v470 = vunpack.c.l.b16 %v262
        %v471 = vunpack.c.l.b16 %v263
        %v472 = vunpack.c.l.b16 %v264
        %v473 = vunpack.c.l.b16 %v265
        %v474 = vunpack.c.l.b16 %v266
        %v475 = vunpack.c.l.b16 %v267
        %v476 = vunpack.c.l.b16 %v268
        %v477 = vunpack.c.l.b16 %v269
        %v478 = vunpack.c.l.b16 %v270
        %v479 = vunpack.c.l.b16 %v271
        %v480 = vunpack.c.l.b16 %v272
        %v481 = vunpack.c.l.b16 %v273
        %v482 = vunpack.c.l.b16 %v274
        %v483 = vunpack.c.l.b16 %v275
        %v484 = vunpack.c.l.b16 %v276
        %v485 = vunpack.c.l.b16 %v277
        %v486 = vunpack.c.l.b16 %v278
        %v487 = vunpack.c.l.b16 %v279
        %v488 = vunpack.c.l.b16 %v280
        %v489 = vunpack.c.l.b16 %v281
        %v490 = vunpack.c.l.b16 %v282
        %v491 = vunpack.c.l.b16 %v283
        %v492 = vunpack.c.l.b16 %v284
        %v493 = vunpack.c.l.b16 %v285
        %v494 = vunpack.c.l.b16 %v286
        %v495 = vunpack.c.l.b16 %v287
        %v496 = vunpack.c.l.b16 %v288
        %v497 = vunpack.c.l.b16 %v289
        %v498 = vunpack.c.l.b16 %v290
        %v499 = vunpack.c.l.b16 %v291
        %v500 = vunpack.c.l.b16 %v292
        %v501 = vunpack.c.l.b16 %v293
        %v502 = vunpack.c.l.b16 %v294
        %v503 = vunpack.c.l.b16 %v295
        %v504 = vunpack.c.l.b16 %v296
        %v505 = vunpack.c.l.b16 %v297
        %v506 = vunpack.c.l.b16 %v298
        %v507 = vunpack.c.l.b16 %v299
        %v508 = vunpack.c.l.b16 %v300
        %v509 = vunpack.c.l.b16 %v301
        %v510 = vunpack.c.l.b16 %v302
        %v511 = vunpack.c.l.b16 %v303
        %v512 = vunpack.c.l.b16 %v304
        %v513 = vunpack.c.l.b16 %v305
        %v514 = vunpack.c.l.b16 %v306
        %v515 = vunpack.c.l.b16 %v307
        %v516 = vunpack.c.l.b16 %v308
        %v517 = vunpack.c.l.b16 %v309
        %v518 = vunpack.c.l.b16 %v310
        %v519 = vunpack.c.l.b16 %v311
        %v520 = vunpack.c.l.b16 %v312
        %v521 = vunpack.c.l.b16 %v313
        %v522 = vunpack.c.l.b16 %v314
        %v523 = vunpack.c.l.b16 %v315
        %v524 = vunpack.c.l.b16 %v316
        %v525 = vunpack.c.l.b16 %v317
        %v526 = vunpack.c.l.b16 %v318
        %v527 = vunpack.c.l.b16 %v319
        %v528 = vunpack.c.l.b16 %v320
        %v529 = vunpack.c.l.b16 %v321
        %v530 = vunpack.c.l.b16 %v322
        %v531 = vunpack.c.l.b16 %v323
        %v532 = vunpack.c.l.b16 %v324
        %v533 = vunpack.c.l.b16 %v325
        %v534 = vunpack.c.l.b16 %v326
        %v535 = vunpack.c.l.b16 %v327
        %v536 = vunpack.c.l.b16 %v328
        %v537 = vunpack.c.l.b16 %v329
        %v538 = vunpack.c.l.b16 %v330
        %v539 = vunpack.c.l.b16 %v331
        %v540 = vunpack.c.l.b16 %v332
        %v541 = vunpack.c.l.b16 %v333
        %v542 = vunpack.c.l.b16 %v334
        %v543 = vunpack.c.l.b16 %v335
        %v544 = vpack.c.b16 %v465, %v464
        %v545 = vpack.c.b16 %v467, %v466
        %v546 = vpack.c.b16 %v469, %v468
        %v547 = vpack.c.b16 %v471, %v470
        %v548 = vpack.c.b16 %v473, %v472
        %v549 = vpack.c.b16 %v475, %v474
        %v550 = vpack.c.b16 %v477, %v476
        %v551 = vpack.c.b16 %v479, %v478
        %v552 = vpack.c.b16 %v481, %v480
        %v553 = vpack.c.b16 %v483, %v482
        %v554 = vpack.c.b16 %v485, %v484
        %v555 = vpack.c.b16 %v487, %v486
        %v556 = vpack.c.b16 %v489, %v488
        %v557 = vpack.c.b16 %v491, %v490
        %v558 = vpack.c.b16 %v493, %v492
        %v559 = vpack.c.b16 %v495, %v494
        %v560 = vpack.c.b16 %v497, %v496
        %v561 = vpack.c.b16 %v499, %v498
        %v562 = vpack.c.b16 %v501, %v500
        %v563 = vpack.c.b16 %v503, %v502
        %v564 = vpack.c.b16 %v505, %v504
        %v565 = vpack.c.b16 %v507, %v506
        %v566 = vpack.c.b16 %v509, %v508
        %v567 = vpack.c.b16 %v511, %v510
        %v568 = vpack.c.b16 %v513, %v512
        %v569 = vpack.c.b16 %v515, %v514
        %v570 = vpack.c.b16 %v517, %v516
        %v571 = vpack.c.b16 %v519, %v518
        %v572 = vpack.c.b16 %v521, %v520
        %v573 = vpack.c.b16 %v523, %v522
        %v574 = vpack.c.b16 %v525, %v524
        %v575 = vpack.c.b16 %v527, %v526
        %v576 = vpack.c.b16 %v529, %v528
        %v577 = vpack.c.b16 %v531, %v530
        %v578 = vpack.c.b16 %v533, %v532
        %v579 = vpack.c.b16 %v535, %v534
        %v580 = vpack.c.b16 %v537, %v536
        %v581 = vpack.c.b16 %v539, %v538
        %v582 = vpack.c.b16 %v541, %v540
        %v583 = vpack.c.b16 %v543, %v542
        %624 = vmatprep.subr.bf16.mxu0 0
        %625 = vmatpush1.bf16.xpose.msra.mxu0 %v544
        %626 = vmatprep.subr.bf16.mxu0 0
        %627 = vmatpush1.bf16.xpose.msra.mxu0 %v545
        %628 = vmatprep.subr.bf16.mxu0 0
        %629 = vmatpush1.bf16.xpose.msra.mxu0 %v546
        %630 = vmatprep.subr.bf16.mxu0 0
        %631 = vmatpush1.bf16.xpose.msra.mxu0 %v547
        %632 = vmatprep.subr.bf16.mxu0 0
        %633 = vmatpush1.bf16.xpose.msra.mxu0 %v548
        %634 = vmatprep.subr.bf16.mxu0 0
        %635 = vmatpush1.bf16.xpose.msra.mxu0 %v549
        %636 = vmatprep.subr.bf16.mxu0 0
        %637 = vmatpush1.bf16.xpose.msra.mxu0 %v550
        %638 = vmatprep.subr.bf16.mxu0 0
        %639 = vmatpush1.bf16.xpose.msra.mxu0 %v551
        %640 = vmatprep.subr.bf16.mxu0 0
        %641 = vmatpush1.bf16.xpose.msra.mxu0 %v552
        %642 = vmatprep.subr.bf16.mxu0 0
        %643 = vmatpush1.bf16.xpose.msra.mxu0 %v553
        %644 = vmatprep.subr.bf16.mxu0 0
        %645 = vmatpush1.bf16.xpose.msra.mxu0 %v554
        %646 = vmatprep.subr.bf16.mxu0 0
        %647 = vmatpush1.bf16.xpose.msra.mxu0 %v555
        %648 = vmatprep.subr.bf16.mxu0 0
        %649 = vmatpush1.bf16.xpose.msra.mxu0 %v556
        %650 = vmatprep.subr.bf16.mxu0 0
        %651 = vmatpush1.bf16.xpose.msra.mxu0 %v557
        %652 = vmatprep.subr.bf16.mxu0 0
        %653 = vmatpush1.bf16.xpose.msra.mxu0 %v558
        %654 = vmatprep.subr.bf16.mxu0 0
        %655 = vmatpush1.bf16.xpose.msra.mxu0 %v559
        %656 = vmatprep.mubr.bf16.mxu0 0
        %657 = vmatmul.mubr.bf16.gmra.mrb[0].mxu0 %v368
        %v658 = vpop.f32.mrb[0].mxu0
        %v659 = vadd.f32 0.0, %v658
        %v660 = vpop.f32.mrb[0].mxu0
        %v661 = vadd.f32 0.0, %v660
        %v662 = vpop.f32.mrb[0].mxu0
        %v663 = vadd.f32 0.0, %v662
        %v664 = vpop.f32.mrb[0].mxu0
        %v665 = vadd.f32 0.0, %v664
        %666 = vmatprep.mubr.bf16.mxu0 0
        %667 = vmatmul.mubr.bf16.gmra.mrb[0].mxu0 %v369
        %v668 = vpop.f32.mrb[0].mxu0
        %v669 = vadd.f32 0.0, %v668
        %v670 = vpop.f32.mrb[0].mxu0
        %v671 = vadd.f32 0.0, %v670
        %v672 = vpop.f32.mrb[0].mxu0
        %v673 = vadd.f32 0.0, %v672
        %v674 = vpop.f32.mrb[0].mxu0
        %v675 = vadd.f32 0.0, %v674
        %676 = vmatprep.mubr.bf16.mxu0 0
        %677 = vmatmul.mubr.bf16.gmra.mrb[0].mxu0 %v370
        %v678 = vpop.f32.mrb[0].mxu0
        %v679 = vadd.f32 0.0, %v678
        %v680 = vpop.f32.mrb[0].mxu0
        %v681 = vadd.f32 0.0, %v680
        %v682 = vpop.f32.mrb[0].mxu0
        %v683 = vadd.f32 0.0, %v682
        %v684 = vpop.f32.mrb[0].mxu0
        %v685 = vadd.f32 0.0, %v684
        %686 = vmatprep.mubr.bf16.mxu0 0
        %687 = vmatmul.mubr.bf16.gmra.mrb[0].mxu0 %v371
        %v688 = vpop.f32.mrb[0].mxu0
        %v689 = vadd.f32 0.0, %v688
        %v690 = vpop.f32.mrb[0].mxu0
        %v691 = vadd.f32 0.0, %v690
        %v692 = vpop.f32.mrb[0].mxu0
        %v693 = vadd.f32 0.0, %v692
        %v694 = vpop.f32.mrb[0].mxu0
        %v695 = vadd.f32 0.0, %v694
        %696 = vmatprep.mubr.bf16.mxu0 0
        %697 = vmatmul.mubr.bf16.gmra.mrb[0].mxu0 %v372
        %v698 = vpop.f32.mrb[0].mxu0
        %v699 = vadd.f32 0.0, %v698
        %v700 = vpop.f32.mrb[0].mxu0
        %v701 = vadd.f32 0.0, %v700
        %v702 = vpop.f32.mrb[0].mxu0
        %v703 = vadd.f32 0.0, %v702
        %v704 = vpop.f32.mrb[0].mxu0
        %v705 = vadd.f32 0.0, %v704
        %706 = vmatprep.mubr.bf16.mxu0 0
        %707 = vmatmul.mubr.bf16.gmra.mrb[0].mxu0 %v373
        %v708 = vpop.f32.mrb[0].mxu0
        %v709 = vadd.f32 0.0, %v708
        %v710 = vpop.f32.mrb[0].mxu0
        %v711 = vadd.f32 0.0, %v710
        %v712 = vpop.f32.mrb[0].mxu0
        %v713 = vadd.f32 0.0, %v712
        %v714 = vpop.f32.mrb[0].mxu0
        %v715 = vadd.f32 0.0, %v714
        %716 = vmatprep.mubr.bf16.mxu0 0
        %717 = vmatmul.mubr.bf16.gmra.mrb[0].mxu0 %v374
        %v718 = vpop.f32.mrb[0].mxu0
        %v719 = vadd.f32 0.0, %v718
        %v720 = vpop.f32.mrb[0].mxu0
        %v721 = vadd.f32 0.0, %v720
        %v722 = vpop.f32.mrb[0].mxu0
        %v723 = vadd.f32 0.0, %v722
        %v724 = vpop.f32.mrb[0].mxu0
        %v725 = vadd.f32 0.0, %v724
        %726 = vmatprep.mubr.bf16.mxu0 0
        %727 = vmatmul.mubr.bf16.gmra.mrb[0].mxu0 %v375
        %v728 = vpop.f32.mrb[0].mxu0
        %v729 = vadd.f32 0.0, %v728
        %v730 = vpop.f32.mrb[0].mxu0
        %v731 = vadd.f32 0.0, %v730
        %v732 = vpop.f32.mrb[0].mxu0
        %v733 = vadd.f32 0.0, %v732
        %v734 = vpop.f32.mrb[0].mxu0
        %v735 = vadd.f32 0.0, %v734
        %736 = vdwg.mxu0
        %737 = vmatprep.subr.bf16.mxu0 0
        %738 = vmatpush1.bf16.xpose.msra.mxu0 %v560
        %739 = vmatprep.subr.bf16.mxu0 0
        %740 = vmatpush1.bf16.xpose.msra.mxu0 %v561
        %741 = vmatprep.subr.bf16.mxu0 0
        %742 = vmatpush1.bf16.xpose.msra.mxu0 %v562
        %743 = vmatprep.subr.bf16.mxu0 0
        %744 = vmatpush1.bf16.xpose.msra.mxu0 %v563
        %745 = vmatprep.subr.bf16.mxu0 0
        %746 = vmatpush1.bf16.xpose.msra.mxu0 %v564
        %747 = vmatprep.subr.bf16.mxu0 0
        %748 = vmatpush1.bf16.xpose.msra.mxu0 %v565
        %749 = vmatprep.subr.bf16.mxu0 0
        %750 = vmatpush1.bf16.xpose.msra.mxu0 %v566
        %751 = vmatprep.subr.bf16.mxu0 0
        %752 = vmatpush1.bf16.xpose.msra.mxu0 %v567
        %753 = vmatprep.subr.bf16.mxu0 0
        %754 = vmatpush1.bf16.xpose.msra.mxu0 %v568
        %755 = vmatprep.subr.bf16.mxu0 0
        %756 = vmatpush1.bf16.xpose.msra.mxu0 %v569
        %757 = vmatprep.subr.bf16.mxu0 0
        %758 = vmatpush1.bf16.xpose.msra.mxu0 %v570
        %759 = vmatprep.subr.bf16.mxu0 0
        %760 = vmatpush1.bf16.xpose.msra.mxu0 %v571
        %761 = vmatprep.subr.bf16.mxu0 0
        %762 = vmatpush1.bf16.xpose.msra.mxu0 %v572
        %763 = vmatprep.subr.bf16.mxu0 0
        %764 = vmatpush1.bf16.xpose.msra.mxu0 %v573
        %765 = vmatprep.subr.bf16.mxu0 0
        %766 = vmatpush1.bf16.xpose.msra.mxu0 %v574
        %767 = vmatprep.subr.bf16.mxu0 0
        %768 = vmatpush1.bf16.xpose.msra.mxu0 %v575
        %769 = vmatprep.mubr.bf16.mxu0 0
        %770 = vmatmul.mubr.bf16.gmra.mrb[0].mxu0 %v368
        %v771 = vpop.f32.mrb[0].mxu0
        %v772 = vadd.f32 0.0, %v771
        %v773 = vpop.f32.mrb[0].mxu0
        %v774 = vadd.f32 0.0, %v773
        %v775 = vpop.f32.mrb[0].mxu0
        %v776 = vadd.f32 0.0, %v775
        %v777 = vpop.f32.mrb[0].mxu0
        %v778 = vadd.f32 0.0, %v777
        %779 = vmatprep.mubr.bf16.mxu0 0
        %780 = vmatmul.mubr.bf16.gmra.mrb[0].mxu0 %v369
        %v781 = vpop.f32.mrb[0].mxu0
        %v782 = vadd.f32 0.0, %v781
        %v783 = vpop.f32.mrb[0].mxu0
        %v784 = vadd.f32 0.0, %v783
        %v785 = vpop.f32.mrb[0].mxu0
        %v786 = vadd.f32 0.0, %v785
        %v787 = vpop.f32.mrb[0].mxu0
        %v788 = vadd.f32 0.0, %v787
        %789 = vmatprep.mubr.bf16.mxu0 0
        %790 = vmatmul.mubr.bf16.gmra.mrb[0].mxu0 %v370
        %v791 = vpop.f32.mrb[0].mxu0
        %v792 = vadd.f32 0.0, %v791
        %v793 = vpop.f32.mrb[0].mxu0
        %v794 = vadd.f32 0.0, %v793
        %v795 = vpop.f32.mrb[0].mxu0
        %v796 = vadd.f32 0.0, %v795
        %v797 = vpop.f32.mrb[0].mxu0
        %v798 = vadd.f32 0.0, %v797
        %799 = vmatprep.mubr.bf16.mxu0 0
        %800 = vmatmul.mubr.bf16.gmra.mrb[0].mxu0 %v371
        %v801 = vpop.f32.mrb[0].mxu0
        %v802 = vadd.f32 0.0, %v801
        %v803 = vpop.f32.mrb[0].mxu0
        %v804 = vadd.f32 0.0, %v803
        %v805 = vpop.f32.mrb[0].mxu0
        %v806 = vadd.f32 0.0, %v805
        %v807 = vpop.f32.mrb[0].mxu0
        %v808 = vadd.f32 0.0, %v807
        %809 = vmatprep.mubr.bf16.mxu0 0
        %810 = vmatmul.mubr.bf16.gmra.mrb[0].mxu0 %v372
        %v811 = vpop.f32.mrb[0].mxu0
        %v812 = vadd.f32 0.0, %v811
        %v813 = vpop.f32.mrb[0].mxu0
        %v814 = vadd.f32 0.0, %v813
        %v815 = vpop.f32.mrb[0].mxu0
        %v816 = vadd.f32 0.0, %v815
        %v817 = vpop.f32.mrb[0].mxu0
        %v818 = vadd.f32 0.0, %v817
        %819 = vmatprep.mubr.bf16.mxu0 0
        %820 = vmatmul.mubr.bf16.gmra.mrb[0].mxu0 %v373
        %v821 = vpop.f32.mrb[0].mxu0
        %v822 = vadd.f32 0.0, %v821
        %v823 = vpop.f32.mrb[0].mxu0
        %v824 = vadd.f32 0.0, %v823
        %v825 = vpop.f32.mrb[0].mxu0
        %v826 = vadd.f32 0.0, %v825
        %v827 = vpop.f32.mrb[0].mxu0
        %v828 = vadd.f32 0.0, %v827
        %829 = vmatprep.mubr.bf16.mxu0 0
        %830 = vmatmul.mubr.bf16.gmra.mrb[0].mxu0 %v374
        %v831 = vpop.f32.mrb[0].mxu0
        %v832 = vadd.f32 0.0, %v831
        %v833 = vpop.f32.mrb[0].mxu0
        %v834 = vadd.f32 0.0, %v833
        %v835 = vpop.f32.mrb[0].mxu0
        %v836 = vadd.f32 0.0, %v835
        %v837 = vpop.f32.mrb[0].mxu0
        %v838 = vadd.f32 0.0, %v837
        %839 = vmatprep.mubr.bf16.mxu0 0
        %840 = vmatmul.mubr.bf16.gmra.mrb[0].mxu0 %v375
        %v841 = vpop.f32.mrb[0].mxu0
        %v842 = vadd.f32 0.0, %v841
        %v843 = vpop.f32.mrb[0].mxu0
        %v844 = vadd.f32 0.0, %v843
        %v845 = vpop.f32.mrb[0].mxu0
        %v846 = vadd.f32 0.0, %v845
        %v847 = vpop.f32.mrb[0].mxu0
        %v848 = vadd.f32 0.0, %v847
        %849 = vdwg.mxu0
        %850 = vmatprep.subr.bf16.mxu0 0
        %851 = vmatpush1.bf16.xpose.msra.mxu0 %v576
        %852 = vmatprep.subr.bf16.mxu0 0
        %853 = vmatpush1.bf16.xpose.msra.mxu0 %v577
        %854 = vmatprep.subr.bf16.mxu0 0
        %855 = vmatpush1.bf16.xpose.msra.mxu0 %v578
        %856 = vmatprep.subr.bf16.mxu0 0
        %857 = vmatpush1.bf16.xpose.msra.mxu0 %v579
        %858 = vmatprep.subr.bf16.mxu0 0
        %859 = vmatpush1.bf16.xpose.msra.mxu0 %v580
        %860 = vmatprep.subr.bf16.mxu0 0
        %861 = vmatpush1.bf16.xpose.msra.mxu0 %v581
        %862 = vmatprep.subr.bf16.mxu0 0
        %863 = vmatpush1.bf16.xpose.msra.mxu0 %v582
        %864 = vmatprep.subr.bf16.mxu0 0
        %865 = vmatpush1.bf16.xpose.msra.mxu0 %v583
        %866 = vmatprep.subr.bf16.mxu0 0
        %867 = vmatpush1.bf16.xpose.msra.mxu0 0
        %868 = vmatprep.subr.bf16.mxu0 0
        %869 = vmatpush1.bf16.xpose.msra.mxu0 0
        %870 = vmatprep.subr.bf16.mxu0 0
        %871 = vmatpush1.bf16.xpose.msra.mxu0 0
        %872 = vmatprep.subr.bf16.mxu0 0
        %873 = vmatpush1.bf16.xpose.msra.mxu0 0
        %874 = vmatprep.subr.bf16.mxu0 0
        %875 = vmatpush1.bf16.xpose.msra.mxu0 0
        %876 = vmatprep.subr.bf16.mxu0 0
        %877 = vmatpush1.bf16.xpose.msra.mxu0 0
        %878 = vmatprep.subr.bf16.mxu0 0
        %879 = vmatpush1.bf16.xpose.msra.mxu0 0
        %880 = vmatprep.subr.bf16.mxu0 0
        %881 = vmatpush1.bf16.xpose.msra.mxu0 0
        %882 = vmatprep.mubr.bf16.mxu0 0
        %883 = vmatmul.mubr.bf16.gmra.mrb[0].mxu0 %v368
        %v884 = vpop.f32.mrb[0].mxu0
        %v885 = vadd.f32 0.0, %v884
        %v886 = vpop.f32.mrb[0].mxu0
        %v887 = vpop.f32.mrb[0].mxu0
        %v888 = vadd.f32 0.0, %v887
        %v889 = vpop.f32.mrb[0].mxu0
        %890 = vmatprep.mubr.bf16.mxu0 0
        %891 = vmatmul.mubr.bf16.gmra.mrb[0].mxu0 %v369
        %v892 = vpop.f32.mrb[0].mxu0
        %v893 = vadd.f32 0.0, %v892
        %v894 = vpop.f32.mrb[0].mxu0
        %v895 = vpop.f32.mrb[0].mxu0
        %v896 = vadd.f32 0.0, %v895
        %v897 = vpop.f32.mrb[0].mxu0
        %898 = vmatprep.mubr.bf16.mxu0 0
        %899 = vmatmul.mubr.bf16.gmra.mrb[0].mxu0 %v370
        %v900 = vpop.f32.mrb[0].mxu0
        %v901 = vadd.f32 0.0, %v900
        %v902 = vpop.f32.mrb[0].mxu0
        %v903 = vpop.f32.mrb[0].mxu0
        %v904 = vadd.f32 0.0, %v903
        %v905 = vpop.f32.mrb[0].mxu0
        %906 = vmatprep.mubr.bf16.mxu0 0
        %907 = vmatmul.mubr.bf16.gmra.mrb[0].mxu0 %v371
        %v908 = vpop.f32.mrb[0].mxu0
        %v909 = vadd.f32 0.0, %v908
        %v910 = vpop.f32.mrb[0].mxu0
        %v911 = vpop.f32.mrb[0].mxu0
        %v912 = vadd.f32 0.0, %v911
        %v913 = vpop.f32.mrb[0].mxu0
        %914 = vmatprep.mubr.bf16.mxu0 0
        %915 = vmatmul.mubr.bf16.gmra.mrb[0].mxu0 %v372
        %v916 = vpop.f32.mrb[0].mxu0
        %v917 = vadd.f32 0.0, %v916
        %v918 = vpop.f32.mrb[0].mxu0
        %v919 = vpop.f32.mrb[0].mxu0
        %v920 = vadd.f32 0.0, %v919
        %v921 = vpop.f32.mrb[0].mxu0
        %922 = vmatprep.mubr.bf16.mxu0 0
        %923 = vmatmul.mubr.bf16.gmra.mrb[0].mxu0 %v373
        %v924 = vpop.f32.mrb[0].mxu0
        %v925 = vadd.f32 0.0, %v924
        %v926 = vpop.f32.mrb[0].mxu0
        %v927 = vpop.f32.mrb[0].mxu0
        %v928 = vadd.f32 0.0, %v927
        %v929 = vpop.f32.mrb[0].mxu0
        %930 = vmatprep.mubr.bf16.mxu0 0
        %931 = vmatmul.mubr.bf16.gmra.mrb[0].mxu0 %v374
        %v932 = vpop.f32.mrb[0].mxu0
        %v933 = vadd.f32 0.0, %v932
        %v934 = vpop.f32.mrb[0].mxu0
        %v935 = vpop.f32.mrb[0].mxu0
        %v936 = vadd.f32 0.0, %v935
        %v937 = vpop.f32.mrb[0].mxu0
        %938 = vmatprep.mubr.bf16.mxu0 0
        %939 = vmatmul.mubr.bf16.gmra.mrb[0].mxu0 %v375
        %v940 = vpop.f32.mrb[0].mxu0
        %v941 = vadd.f32 0.0, %v940
        %v942 = vpop.f32.mrb[0].mxu0
        %v943 = vpop.f32.mrb[0].mxu0
        %v944 = vadd.f32 0.0, %v943
        %v945 = vpop.f32.mrb[0].mxu0
        %946 = vdwg.mxu0
        %v947 = vmul.f32 %v659, 10.0
        %v948 = vmul.f32 %v661, 10.0
        %v949 = vmul.f32 %v772, 10.0
        %v950 = vmul.f32 %v774, 10.0
        %v951 = vmul.f32 %v885, 10.0
        %v952 = vmul.f32 %v663, 10.0
        %v953 = vmul.f32 %v665, 10.0
        %v954 = vmul.f32 %v776, 10.0
        %v955 = vmul.f32 %v778, 10.0
        %v956 = vmul.f32 %v888, 10.0
        %v957 = vmul.f32 %v669, 10.0
        %v958 = vmul.f32 %v671, 10.0
        %v959 = vmul.f32 %v782, 10.0
        %v960 = vmul.f32 %v784, 10.0
        %v961 = vmul.f32 %v893, 10.0
        %v962 = vmul.f32 %v673, 10.0
        %v963 = vmul.f32 %v675, 10.0
        %v964 = vmul.f32 %v786, 10.0
        %v965 = vmul.f32 %v788, 10.0
        %v966 = vmul.f32 %v896, 10.0
        %v967 = vmul.f32 %v679, 10.0
        %v968 = vmul.f32 %v681, 10.0
        %v969 = vmul.f32 %v792, 10.0
        %v970 = vmul.f32 %v794, 10.0
        %v971 = vmul.f32 %v901, 10.0
        %v972 = vmul.f32 %v683, 10.0
        %v973 = vmul.f32 %v685, 10.0
        %v974 = vmul.f32 %v796, 10.0
        %v975 = vmul.f32 %v798, 10.0
        %v976 = vmul.f32 %v904, 10.0
        %v977 = vmul.f32 %v689, 10.0
        %v978 = vmul.f32 %v691, 10.0
        %v979 = vmul.f32 %v802, 10.0
        %v980 = vmul.f32 %v804, 10.0
        %v981 = vmul.f32 %v909, 10.0
        %v982 = vmul.f32 %v693, 10.0
        %v983 = vmul.f32 %v695, 10.0
        %v984 = vmul.f32 %v806, 10.0
        %v985 = vmul.f32 %v808, 10.0
        %v986 = vmul.f32 %v912, 10.0
        %v987 = vmul.f32 %v699, 10.0
        %v988 = vmul.f32 %v701, 10.0
        %v989 = vmul.f32 %v812, 10.0
        %v990 = vmul.f32 %v814, 10.0
        %v991 = vmul.f32 %v917, 10.0
        %v992 = vmul.f32 %v703, 10.0
        %v993 = vmul.f32 %v705, 10.0
        %v994 = vmul.f32 %v816, 10.0
        %v995 = vmul.f32 %v818, 10.0
        %v996 = vmul.f32 %v920, 10.0
        %v997 = vmul.f32 %v709, 10.0
        %v998 = vmul.f32 %v711, 10.0
        %v999 = vmul.f32 %v822, 10.0
        %v1000 = vmul.f32 %v824, 10.0
        %v1001 = vmul.f32 %v925, 10.0
        %v1002 = vmul.f32 %v713, 10.0
        %v1003 = vmul.f32 %v715, 10.0
        %v1004 = vmul.f32 %v826, 10.0
        %v1005 = vmul.f32 %v828, 10.0
        %v1006 = vmul.f32 %v928, 10.0
        %v1007 = vmul.f32 %v719, 10.0
        %v1008 = vmul.f32 %v721, 10.0
        %v1009 = vmul.f32 %v832, 10.0
        %v1010 = vmul.f32 %v834, 10.0
        %v1011 = vmul.f32 %v933, 10.0
        %v1012 = vmul.f32 %v723, 10.0
        %v1013 = vmul.f32 %v725, 10.0
        %v1014 = vmul.f32 %v836, 10.0
        %v1015 = vmul.f32 %v838, 10.0
        %v1016 = vmul.f32 %v936, 10.0
        %v1017 = vmul.f32 %v729, 10.0
        %v1018 = vmul.f32 %v731, 10.0
        %v1019 = vmul.f32 %v842, 10.0
        %v1020 = vmul.f32 %v844, 10.0
        %v1021 = vmul.f32 %v941, 10.0
        %v1022 = vmul.f32 %v733, 10.0
        %v1023 = vmul.f32 %v735, 10.0
        %v1024 = vmul.f32 %v846, 10.0
        %v1025 = vmul.f32 %v848, 10.0
        %v1026 = vmul.f32 %v944, 10.0
        %v1027 = vlaneseq
        %v1028 = vshrl.u32 %v1027, 7
        %v1029 = vadd.s32 %v1028, 8
        %v1030 = vadd.s32 %v1028, 16
        %v1031 = vadd.s32 %v1028, 24
        %v1032 = vadd.s32 %v1028, 32
        %v1033 = vadd.s32 %v1028, 40
        %v1034 = vadd.s32 %v1028, 48
        %v1035 = vadd.s32 %v1028, 56
        %v1036 = vadd.s32 %v1028, 64
        %v1037 = vadd.s32 %v1028, 72
        %v1038 = vadd.s32 %v1028, 80
        %v1039 = vadd.s32 %v1028, 88
        %v1040 = vadd.s32 %v1028, 96
        %v1041 = vadd.s32 %v1028, 104
        %v1042 = vadd.s32 %v1028, 112
        %v1043 = vadd.s32 %v1028, 120
        %v1044 = vlaneseq
        %v1045 = vand.u32 %v1044, 127
        %v1046 = vadd.s32 %v1045, 128
        %v1047 = vadd.s32 %v1045, 256
        %v1048 = vadd.s32 %v1045, 384
        %v1049 = vadd.s32 %v1045, 512
        %v1050 = vsub.s32 %v1045, %v1028
        %v1051 = vsub.s32 %v1046, %v1028
        %v1052 = vsub.s32 %v1047, %v1028
        %v1053 = vsub.s32 %v1048, %v1028
        %v1054 = vsub.s32 %v1049, %v1028
        %v1055 = vsub.s32 %v1045, %v1029
        %v1056 = vsub.s32 %v1046, %v1029
        %v1057 = vsub.s32 %v1047, %v1029
        %v1058 = vsub.s32 %v1048, %v1029
        %v1059 = vsub.s32 %v1049, %v1029
        %v1060 = vsub.s32 %v1045, %v1030
        %v1061 = vsub.s32 %v1046, %v1030
        %v1062 = vsub.s32 %v1047, %v1030
        %v1063 = vsub.s32 %v1048, %v1030
        %v1064 = vsub.s32 %v1049, %v1030
        %v1065 = vsub.s32 %v1045, %v1031
        %v1066 = vsub.s32 %v1046, %v1031
        %v1067 = vsub.s32 %v1047, %v1031
        %v1068 = vsub.s32 %v1048, %v1031
        %v1069 = vsub.s32 %v1049, %v1031
        %v1070 = vsub.s32 %v1045, %v1032
        %v1071 = vsub.s32 %v1046, %v1032
        %v1072 = vsub.s32 %v1047, %v1032
        %v1073 = vsub.s32 %v1048, %v1032
        %v1074 = vsub.s32 %v1049, %v1032
        %v1075 = vsub.s32 %v1045, %v1033
        %v1076 = vsub.s32 %v1046, %v1033
        %v1077 = vsub.s32 %v1047, %v1033
        %v1078 = vsub.s32 %v1048, %v1033
        %v1079 = vsub.s32 %v1049, %v1033
        %v1080 = vsub.s32 %v1045, %v1034
        %v1081 = vsub.s32 %v1046, %v1034
        %v1082 = vsub.s32 %v1047, %v1034
        %v1083 = vsub.s32 %v1048, %v1034
        %v1084 = vsub.s32 %v1049, %v1034
        %v1085 = vsub.s32 %v1045, %v1035
        %v1086 = vsub.s32 %v1046, %v1035
        %v1087 = vsub.s32 %v1047, %v1035
        %v1088 = vsub.s32 %v1048, %v1035
        %v1089 = vsub.s32 %v1049, %v1035
        %v1090 = vsub.s32 %v1045, %v1036
        %v1091 = vsub.s32 %v1046, %v1036
        %v1092 = vsub.s32 %v1047, %v1036
        %v1093 = vsub.s32 %v1048, %v1036
        %v1094 = vsub.s32 %v1049, %v1036
        %v1095 = vsub.s32 %v1045, %v1037
        %v1096 = vsub.s32 %v1046, %v1037
        %v1097 = vsub.s32 %v1047, %v1037
        %v1098 = vsub.s32 %v1048, %v1037
        %v1099 = vsub.s32 %v1049, %v1037
        %v1100 = vsub.s32 %v1045, %v1038
        %v1101 = vsub.s32 %v1046, %v1038
        %v1102 = vsub.s32 %v1047, %v1038
        %v1103 = vsub.s32 %v1048, %v1038
        %v1104 = vsub.s32 %v1049, %v1038
        %v1105 = vsub.s32 %v1045, %v1039
        %v1106 = vsub.s32 %v1046, %v1039
        %v1107 = vsub.s32 %v1047, %v1039
        %v1108 = vsub.s32 %v1048, %v1039
        %v1109 = vsub.s32 %v1049, %v1039
        %v1110 = vsub.s32 %v1045, %v1040
        %v1111 = vsub.s32 %v1046, %v1040
        %v1112 = vsub.s32 %v1047, %v1040
        %v1113 = vsub.s32 %v1048, %v1040
        %v1114 = vsub.s32 %v1049, %v1040
        %v1115 = vsub.s32 %v1045, %v1041
        %v1116 = vsub.s32 %v1046, %v1041
        %v1117 = vsub.s32 %v1047, %v1041
        %v1118 = vsub.s32 %v1048, %v1041
        %v1119 = vsub.s32 %v1049, %v1041
        %v1120 = vsub.s32 %v1045, %v1042
        %v1121 = vsub.s32 %v1046, %v1042
        %v1122 = vsub.s32 %v1047, %v1042
        %v1123 = vsub.s32 %v1048, %v1042
        %v1124 = vsub.s32 %v1049, %v1042
        %v1125 = vsub.s32 %v1045, %v1043
        %v1126 = vsub.s32 %v1046, %v1043
        %v1127 = vsub.s32 %v1047, %v1043
        %v1128 = vsub.s32 %v1048, %v1043
        %v1129 = vsub.s32 %v1049, %v1043
        %s1130 = smul.u32 %s21, 128
        %s1131 = smul.u32 %s22, 640
        %s1132 = ssub.s32 %s1130, %s1131
        %v1133 = vstv %s1132
        %vm1134 = vcmp.eq.s32.totalorder %v1050, %v1133
        %vm1135 = vcmp.eq.s32.totalorder %v1051, %v1133
        %vm1136 = vcmp.eq.s32.totalorder %v1052, %v1133
        %vm1137 = vcmp.eq.s32.totalorder %v1053, %v1133
        %vm1138 = vcmp.eq.s32.totalorder %v1054, %v1133
        %vm1139 = vcmp.eq.s32.totalorder %v1055, %v1133
        %vm1140 = vcmp.eq.s32.totalorder %v1056, %v1133
        %vm1141 = vcmp.eq.s32.totalorder %v1057, %v1133
        %vm1142 = vcmp.eq.s32.totalorder %v1058, %v1133
        %vm1143 = vcmp.eq.s32.totalorder %v1059, %v1133
        %vm1144 = vcmp.eq.s32.totalorder %v1060, %v1133
        %vm1145 = vcmp.eq.s32.totalorder %v1061, %v1133
        %vm1146 = vcmp.eq.s32.totalorder %v1062, %v1133
        %vm1147 = vcmp.eq.s32.totalorder %v1063, %v1133
        %vm1148 = vcmp.eq.s32.totalorder %v1064, %v1133
        %vm1149 = vcmp.eq.s32.totalorder %v1065, %v1133
        %vm1150 = vcmp.eq.s32.totalorder %v1066, %v1133
        %vm1151 = vcmp.eq.s32.totalorder %v1067, %v1133
        %vm1152 = vcmp.eq.s32.totalorder %v1068, %v1133
        %vm1153 = vcmp.eq.s32.totalorder %v1069, %v1133
        %vm1154 = vcmp.eq.s32.totalorder %v1070, %v1133
        %vm1155 = vcmp.eq.s32.totalorder %v1071, %v1133
        %vm1156 = vcmp.eq.s32.totalorder %v1072, %v1133
        %vm1157 = vcmp.eq.s32.totalorder %v1073, %v1133
        %vm1158 = vcmp.eq.s32.totalorder %v1074, %v1133
        %vm1159 = vcmp.eq.s32.totalorder %v1075, %v1133
        %vm1160 = vcmp.eq.s32.totalorder %v1076, %v1133
        %vm1161 = vcmp.eq.s32.totalorder %v1077, %v1133
        %vm1162 = vcmp.eq.s32.totalorder %v1078, %v1133
        %vm1163 = vcmp.eq.s32.totalorder %v1079, %v1133
        %vm1164 = vcmp.eq.s32.totalorder %v1080, %v1133
        %vm1165 = vcmp.eq.s32.totalorder %v1081, %v1133
        %vm1166 = vcmp.eq.s32.totalorder %v1082, %v1133
        %vm1167 = vcmp.eq.s32.totalorder %v1083, %v1133
        %vm1168 = vcmp.eq.s32.totalorder %v1084, %v1133
        %vm1169 = vcmp.eq.s32.totalorder %v1085, %v1133
        %vm1170 = vcmp.eq.s32.totalorder %v1086, %v1133
        %vm1171 = vcmp.eq.s32.totalorder %v1087, %v1133
        %vm1172 = vcmp.eq.s32.totalorder %v1088, %v1133
        %vm1173 = vcmp.eq.s32.totalorder %v1089, %v1133
        %vm1174 = vcmp.eq.s32.totalorder %v1090, %v1133
        %vm1175 = vcmp.eq.s32.totalorder %v1091, %v1133
        %vm1176 = vcmp.eq.s32.totalorder %v1092, %v1133
        %vm1177 = vcmp.eq.s32.totalorder %v1093, %v1133
        %vm1178 = vcmp.eq.s32.totalorder %v1094, %v1133
        %vm1179 = vcmp.eq.s32.totalorder %v1095, %v1133
        %vm1180 = vcmp.eq.s32.totalorder %v1096, %v1133
        %vm1181 = vcmp.eq.s32.totalorder %v1097, %v1133
        %vm1182 = vcmp.eq.s32.totalorder %v1098, %v1133
        %vm1183 = vcmp.eq.s32.totalorder %v1099, %v1133
        %vm1184 = vcmp.eq.s32.totalorder %v1100, %v1133
        %vm1185 = vcmp.eq.s32.totalorder %v1101, %v1133
        %vm1186 = vcmp.eq.s32.totalorder %v1102, %v1133
        %vm1187 = vcmp.eq.s32.totalorder %v1103, %v1133
        %vm1188 = vcmp.eq.s32.totalorder %v1104, %v1133
        %vm1189 = vcmp.eq.s32.totalorder %v1105, %v1133
        %vm1190 = vcmp.eq.s32.totalorder %v1106, %v1133
        %vm1191 = vcmp.eq.s32.totalorder %v1107, %v1133
        %vm1192 = vcmp.eq.s32.totalorder %v1108, %v1133
        %vm1193 = vcmp.eq.s32.totalorder %v1109, %v1133
        %vm1194 = vcmp.eq.s32.totalorder %v1110, %v1133
        %vm1195 = vcmp.eq.s32.totalorder %v1111, %v1133
        %vm1196 = vcmp.eq.s32.totalorder %v1112, %v1133
        %vm1197 = vcmp.eq.s32.totalorder %v1113, %v1133
        %vm1198 = vcmp.eq.s32.totalorder %v1114, %v1133
        %vm1199 = vcmp.eq.s32.totalorder %v1115, %v1133
        %vm1200 = vcmp.eq.s32.totalorder %v1116, %v1133
        %vm1201 = vcmp.eq.s32.totalorder %v1117, %v1133
        %vm1202 = vcmp.eq.s32.totalorder %v1118, %v1133
        %vm1203 = vcmp.eq.s32.totalorder %v1119, %v1133
        %vm1204 = vcmp.eq.s32.totalorder %v1120, %v1133
        %vm1205 = vcmp.eq.s32.totalorder %v1121, %v1133
        %vm1206 = vcmp.eq.s32.totalorder %v1122, %v1133
        %vm1207 = vcmp.eq.s32.totalorder %v1123, %v1133
        %vm1208 = vcmp.eq.s32.totalorder %v1124, %v1133
        %vm1209 = vcmp.eq.s32.totalorder %v1125, %v1133
        %vm1210 = vcmp.eq.s32.totalorder %v1126, %v1133
        %vm1211 = vcmp.eq.s32.totalorder %v1127, %v1133
        %vm1212 = vcmp.eq.s32.totalorder %v1128, %v1133
        %vm1213 = vcmp.eq.s32.totalorder %v1129, %v1133
        %s1214 = ssub.s32 600, %s1131
        %v1215 = vstv %s1214
        %vm1216 = vcmp.ge.s32.totalorder %v1045, %v1215
        %vm1217 = vcmp.ge.s32.totalorder %v1046, %v1215
        %vm1218 = vcmp.ge.s32.totalorder %v1047, %v1215
        %vm1219 = vcmp.ge.s32.totalorder %v1048, %v1215
        %vm1220 = vcmp.ge.s32.totalorder %v1049, %v1215
        %vm1221 = vmor %vm1134, %vm1216
        %vm1222 = vmor %vm1135, %vm1217
        %vm1223 = vmor %vm1136, %vm1218
        %vm1224 = vmor %vm1137, %vm1219
        %vm1225 = vmor %vm1138, %vm1220
        %vm1226 = vmor %vm1139, %vm1216
        %vm1227 = vmor %vm1140, %vm1217
        %vm1228 = vmor %vm1141, %vm1218
        %vm1229 = vmor %vm1142, %vm1219
        %vm1230 = vmor %vm1143, %vm1220
        %vm1231 = vmor %vm1144, %vm1216
        %vm1232 = vmor %vm1145, %vm1217
        %vm1233 = vmor %vm1146, %vm1218
        %vm1234 = vmor %vm1147, %vm1219
        %vm1235 = vmor %vm1148, %vm1220
        %vm1236 = vmor %vm1149, %vm1216
        %vm1237 = vmor %vm1150, %vm1217
        %vm1238 = vmor %vm1151, %vm1218
        %vm1239 = vmor %vm1152, %vm1219
        %vm1240 = vmor %vm1153, %vm1220
        %vm1241 = vmor %vm1154, %vm1216
        %vm1242 = vmor %vm1155, %vm1217
        %vm1243 = vmor %vm1156, %vm1218
        %vm1244 = vmor %vm1157, %vm1219
        %vm1245 = vmor %vm1158, %vm1220
        %vm1246 = vmor %vm1159, %vm1216
        %vm1247 = vmor %vm1160, %vm1217
        %vm1248 = vmor %vm1161, %vm1218
        %vm1249 = vmor %vm1162, %vm1219
        %vm1250 = vmor %vm1163, %vm1220
        %vm1251 = vmor %vm1164, %vm1216
        %vm1252 = vmor %vm1165, %vm1217
        %vm1253 = vmor %vm1166, %vm1218
        %vm1254 = vmor %vm1167, %vm1219
        %vm1255 = vmor %vm1168, %vm1220
        %vm1256 = vmor %vm1169, %vm1216
        %vm1257 = vmor %vm1170, %vm1217
        %vm1258 = vmor %vm1171, %vm1218
        %vm1259 = vmor %vm1172, %vm1219
        %vm1260 = vmor %vm1173, %vm1220
        %vm1261 = vmor %vm1174, %vm1216
        %vm1262 = vmor %vm1175, %vm1217
        %vm1263 = vmor %vm1176, %vm1218
        %vm1264 = vmor %vm1177, %vm1219
        %vm1265 = vmor %vm1178, %vm1220
        %vm1266 = vmor %vm1179, %vm1216
        %vm1267 = vmor %vm1180, %vm1217
        %vm1268 = vmor %vm1181, %vm1218
        %vm1269 = vmor %vm1182, %vm1219
        %vm1270 = vmor %vm1183, %vm1220
        %vm1271 = vmor %vm1184, %vm1216
        %vm1272 = vmor %vm1185, %vm1217
        %vm1273 = vmor %vm1186, %vm1218
        %vm1274 = vmor %vm1187, %vm1219
        %vm1275 = vmor %vm1188, %vm1220
        %vm1276 = vmor %vm1189, %vm1216
        %vm1277 = vmor %vm1190, %vm1217
        %vm1278 = vmor %vm1191, %vm1218
        %vm1279 = vmor %vm1192, %vm1219
        %vm1280 = vmor %vm1193, %vm1220
        %vm1281 = vmor %vm1194, %vm1216
        %vm1282 = vmor %vm1195, %vm1217
        %vm1283 = vmor %vm1196, %vm1218
        %vm1284 = vmor %vm1197, %vm1219
        %vm1285 = vmor %vm1198, %vm1220
        %vm1286 = vmor %vm1199, %vm1216
        %vm1287 = vmor %vm1200, %vm1217
        %vm1288 = vmor %vm1201, %vm1218
        %vm1289 = vmor %vm1202, %vm1219
        %vm1290 = vmor %vm1203, %vm1220
        %vm1291 = vmor %vm1204, %vm1216
        %vm1292 = vmor %vm1205, %vm1217
        %vm1293 = vmor %vm1206, %vm1218
        %vm1294 = vmor %vm1207, %vm1219
        %vm1295 = vmor %vm1208, %vm1220
        %vm1296 = vmor %vm1209, %vm1216
        %vm1297 = vmor %vm1210, %vm1217
        %vm1298 = vmor %vm1211, %vm1218
        %vm1299 = vmor %vm1212, %vm1219
        %vm1300 = vmor %vm1213, %vm1220
        %v1301 = vsel %vm1221, -1e+30, %v947
        %v1302 = vsel %vm1222, -1e+30, %v948
        %v1303 = vsel %vm1223, -1e+30, %v949
        %v1304 = vsel %vm1224, -1e+30, %v950
        %v1305 = vsel %vm1225, -1e+30, %v951
        %v1306 = vsel %vm1226, -1e+30, %v952
        %v1307 = vsel %vm1227, -1e+30, %v953
        %v1308 = vsel %vm1228, -1e+30, %v954
        %v1309 = vsel %vm1229, -1e+30, %v955
        %v1310 = vsel %vm1230, -1e+30, %v956
        %v1311 = vsel %vm1231, -1e+30, %v957
        %v1312 = vsel %vm1232, -1e+30, %v958
        %v1313 = vsel %vm1233, -1e+30, %v959
        %v1314 = vsel %vm1234, -1e+30, %v960
        %v1315 = vsel %vm1235, -1e+30, %v961
        %v1316 = vsel %vm1236, -1e+30, %v962
        %v1317 = vsel %vm1237, -1e+30, %v963
        %v1318 = vsel %vm1238, -1e+30, %v964
        %v1319 = vsel %vm1239, -1e+30, %v965
        %v1320 = vsel %vm1240, -1e+30, %v966
        %v1321 = vsel %vm1241, -1e+30, %v967
        %v1322 = vsel %vm1242, -1e+30, %v968
        %v1323 = vsel %vm1243, -1e+30, %v969
        %v1324 = vsel %vm1244, -1e+30, %v970
        %v1325 = vsel %vm1245, -1e+30, %v971
        %v1326 = vsel %vm1246, -1e+30, %v972
        %v1327 = vsel %vm1247, -1e+30, %v973
        %v1328 = vsel %vm1248, -1e+30, %v974
        %v1329 = vsel %vm1249, -1e+30, %v975
        %v1330 = vsel %vm1250, -1e+30, %v976
        %v1331 = vsel %vm1251, -1e+30, %v977
        %v1332 = vsel %vm1252, -1e+30, %v978
        %v1333 = vsel %vm1253, -1e+30, %v979
        %v1334 = vsel %vm1254, -1e+30, %v980
        %v1335 = vsel %vm1255, -1e+30, %v981
        %v1336 = vsel %vm1256, -1e+30, %v982
        %v1337 = vsel %vm1257, -1e+30, %v983
        %v1338 = vsel %vm1258, -1e+30, %v984
        %v1339 = vsel %vm1259, -1e+30, %v985
        %v1340 = vsel %vm1260, -1e+30, %v986
        %v1341 = vsel %vm1261, -1e+30, %v987
        %v1342 = vsel %vm1262, -1e+30, %v988
        %v1343 = vsel %vm1263, -1e+30, %v989
        %v1344 = vsel %vm1264, -1e+30, %v990
        %v1345 = vsel %vm1265, -1e+30, %v991
        %v1346 = vsel %vm1266, -1e+30, %v992
        %v1347 = vsel %vm1267, -1e+30, %v993
        %v1348 = vsel %vm1268, -1e+30, %v994
        %v1349 = vsel %vm1269, -1e+30, %v995
        %v1350 = vsel %vm1270, -1e+30, %v996
        %v1351 = vsel %vm1271, -1e+30, %v997
        %v1352 = vsel %vm1272, -1e+30, %v998
        %v1353 = vsel %vm1273, -1e+30, %v999
        %v1354 = vsel %vm1274, -1e+30, %v1000
        %v1355 = vsel %vm1275, -1e+30, %v1001
        %v1356 = vsel %vm1276, -1e+30, %v1002
        %v1357 = vsel %vm1277, -1e+30, %v1003
        %v1358 = vsel %vm1278, -1e+30, %v1004
        %v1359 = vsel %vm1279, -1e+30, %v1005
        %v1360 = vsel %vm1280, -1e+30, %v1006
        %v1361 = vsel %vm1281, -1e+30, %v1007
        %v1362 = vsel %vm1282, -1e+30, %v1008
        %v1363 = vsel %vm1283, -1e+30, %v1009
        %v1364 = vsel %vm1284, -1e+30, %v1010
        %v1365 = vsel %vm1285, -1e+30, %v1011
        %v1366 = vsel %vm1286, -1e+30, %v1012
        %v1367 = vsel %vm1287, -1e+30, %v1013
        %v1368 = vsel %vm1288, -1e+30, %v1014
        %v1369 = vsel %vm1289, -1e+30, %v1015
        %v1370 = vsel %vm1290, -1e+30, %v1016
        %v1371 = vsel %vm1291, -1e+30, %v1017
        %v1372 = vsel %vm1292, -1e+30, %v1018
        %v1373 = vsel %vm1293, -1e+30, %v1019
        %v1374 = vsel %vm1294, -1e+30, %v1020
        %v1375 = vsel %vm1295, -1e+30, %v1021
        %v1376 = vsel %vm1296, -1e+30, %v1022
        %v1377 = vsel %vm1297, -1e+30, %v1023
        %v1378 = vsel %vm1298, -1e+30, %v1024
        %v1379 = vsel %vm1299, -1e+30, %v1025
        %v1380 = vsel %vm1300, -1e+30, %v1026
        %v1381 = vld [vmem:[#allocation2] sm:$0xff]
        %v1382 = vld [vmem:[#allocation2 + $0x8] sm:$0xff]
        %v1383 = vld [vmem:[#allocation2 + $0x10] sm:$0xff]
        %v1384 = vld [vmem:[#allocation2 + $0x18] sm:$0xff]
        %v1385 = vld [vmem:[#allocation2 + $0x20] sm:$0xff]
        %v1386 = vld [vmem:[#allocation2 + $0x28] sm:$0xff]
        %v1387 = vld [vmem:[#allocation2 + $0x30] sm:$0xff]
        %v1388 = vld [vmem:[#allocation2 + $0x38] sm:$0xff]
        %v1389 = vld [vmem:[#allocation2 + $0x40] sm:$0xff]
        %v1390 = vld [vmem:[#allocation2 + $0x48] sm:$0xff]
        %v1391 = vld [vmem:[#allocation2 + $0x50] sm:$0xff]
        %v1392 = vld [vmem:[#allocation2 + $0x58] sm:$0xff]
        %v1393 = vld [vmem:[#allocation2 + $0x60] sm:$0xff]
        %v1394 = vld [vmem:[#allocation2 + $0x68] sm:$0xff]
        %v1395 = vld [vmem:[#allocation2 + $0x70] sm:$0xff]
        %v1396 = vld [vmem:[#allocation2 + $0x78] sm:$0xff]
        %v1397 = vmax.f32 %v1301, %v1302
        %v1398 = vmax.f32 %v1397, %v1303
        %v1399 = vmax.f32 %v1398, %v1304
        %v1400 = vmax.f32 %v1399, %v1305
        %1401 = vmax.xlane.f32.xlu0 %v1400
        %v1402 = vpop.xlane.xlu0 %1401
        %v1403 = vmax.f32 %v1306, %v1307
        %v1404 = vmax.f32 %v1403, %v1308
        %v1405 = vmax.f32 %v1404, %v1309
        %v1406 = vmax.f32 %v1405, %v1310
        %1407 = vmax.xlane.f32.xlu0 %v1406
        %v1408 = vpop.xlane.xlu0 %1407
        %v1409 = vmax.f32 %v1311, %v1312
        %v1410 = vmax.f32 %v1409, %v1313
        %v1411 = vmax.f32 %v1410, %v1314
        %v1412 = vmax.f32 %v1411, %v1315
        %1413 = vmax.xlane.f32.xlu0 %v1412
        %v1414 = vpop.xlane.xlu0 %1413
        %v1415 = vmax.f32 %v1316, %v1317
        %v1416 = vmax.f32 %v1415, %v1318
        %v1417 = vmax.f32 %v1416, %v1319
        %v1418 = vmax.f32 %v1417, %v1320
        %1419 = vmax.xlane.f32.xlu0 %v1418
        %v1420 = vpop.xlane.xlu0 %1419
        %v1421 = vmax.f32 %v1321, %v1322
        %v1422 = vmax.f32 %v1421, %v1323
        %v1423 = vmax.f32 %v1422, %v1324
        %v1424 = vmax.f32 %v1423, %v1325
        %1425 = vmax.xlane.f32.xlu0 %v1424
        %v1426 = vpop.xlane.xlu0 %1425
        %v1427 = vmax.f32 %v1326, %v1327
        %v1428 = vmax.f32 %v1427, %v1328
        %v1429 = vmax.f32 %v1428, %v1329
        %v1430 = vmax.f32 %v1429, %v1330
        %1431 = vmax.xlane.f32.xlu0 %v1430
        %v1432 = vpop.xlane.xlu0 %1431
        %v1433 = vmax.f32 %v1331, %v1332
        %v1434 = vmax.f32 %v1433, %v1333
        %v1435 = vmax.f32 %v1434, %v1334
        %v1436 = vmax.f32 %v1435, %v1335
        %1437 = vmax.xlane.f32.xlu0 %v1436
        %v1438 = vpop.xlane.xlu0 %1437
        %v1439 = vmax.f32 %v1336, %v1337
        %v1440 = vmax.f32 %v1439, %v1338
        %v1441 = vmax.f32 %v1440, %v1339
        %v1442 = vmax.f32 %v1441, %v1340
        %1443 = vmax.xlane.f32.xlu0 %v1442
        %v1444 = vpop.xlane.xlu0 %1443
        %v1445 = vmax.f32 %v1341, %v1342
        %v1446 = vmax.f32 %v1445, %v1343
        %v1447 = vmax.f32 %v1446, %v1344
        %v1448 = vmax.f32 %v1447, %v1345
        %1449 = vmax.xlane.f32.xlu0 %v1448
        %v1450 = vpop.xlane.xlu0 %1449
        %v1451 = vmax.f32 %v1346, %v1347
        %v1452 = vmax.f32 %v1451, %v1348
        %v1453 = vmax.f32 %v1452, %v1349
        %v1454 = vmax.f32 %v1453, %v1350
        %1455 = vmax.xlane.f32.xlu0 %v1454
        %v1456 = vpop.xlane.xlu0 %1455
        %v1457 = vmax.f32 %v1351, %v1352
        %v1458 = vmax.f32 %v1457, %v1353
        %v1459 = vmax.f32 %v1458, %v1354
        %v1460 = vmax.f32 %v1459, %v1355
        %1461 = vmax.xlane.f32.xlu0 %v1460
        %v1462 = vpop.xlane.xlu0 %1461
        %v1463 = vmax.f32 %v1356, %v1357
        %v1464 = vmax.f32 %v1463, %v1358
        %v1465 = vmax.f32 %v1464, %v1359
        %v1466 = vmax.f32 %v1465, %v1360
        %1467 = vmax.xlane.f32.xlu0 %v1466
        %v1468 = vpop.xlane.xlu0 %1467
        %v1469 = vmax.f32 %v1361, %v1362
        %v1470 = vmax.f32 %v1469, %v1363
        %v1471 = vmax.f32 %v1470, %v1364
        %v1472 = vmax.f32 %v1471, %v1365
        %1473 = vmax.xlane.f32.xlu0 %v1472
        %v1474 = vpop.xlane.xlu0 %1473
        %v1475 = vmax.f32 %v1366, %v1367
        %v1476 = vmax.f32 %v1475, %v1368
        %v1477 = vmax.f32 %v1476, %v1369
        %v1478 = vmax.f32 %v1477, %v1370
        %1479 = vmax.xlane.f32.xlu0 %v1478
        %v1480 = vpop.xlane.xlu0 %1479
        %v1481 = vmax.f32 %v1371, %v1372
        %v1482 = vmax.f32 %v1481, %v1373
        %v1483 = vmax.f32 %v1482, %v1374
        %v1484 = vmax.f32 %v1483, %v1375
        %1485 = vmax.xlane.f32.xlu0 %v1484
        %v1486 = vpop.xlane.xlu0 %1485
        %v1487 = vmax.f32 %v1376, %v1377
        %v1488 = vmax.f32 %v1487, %v1378
        %v1489 = vmax.f32 %v1488, %v1379
        %v1490 = vmax.f32 %v1489, %v1380
        %1491 = vmax.xlane.f32.xlu0 %v1490
        %v1492 = vpop.xlane.xlu0 %1491
        %v1493 = vmax.f32 %v1381, %v1402
        %v1494 = vmax.f32 %v1382, %v1408
        %v1495 = vmax.f32 %v1383, %v1414
        %v1496 = vmax.f32 %v1384, %v1420
        %v1497 = vmax.f32 %v1385, %v1426
        %v1498 = vmax.f32 %v1386, %v1432
        %v1499 = vmax.f32 %v1387, %v1438
        %v1500 = vmax.f32 %v1388, %v1444
        %v1501 = vmax.f32 %v1389, %v1450
        %v1502 = vmax.f32 %v1390, %v1456
        %v1503 = vmax.f32 %v1391, %v1462
        %v1504 = vmax.f32 %v1392, %v1468
        %v1505 = vmax.f32 %v1393, %v1474
        %v1506 = vmax.f32 %v1394, %v1480
        %v1507 = vmax.f32 %v1395, %v1486
        %v1508 = vmax.f32 %v1396, %v1492
        %v1509 = vsub.f32 %v1381, %v1493
        %v1510 = vsub.f32 %v1382, %v1494
        %v1511 = vsub.f32 %v1383, %v1495
        %v1512 = vsub.f32 %v1384, %v1496
        %v1513 = vsub.f32 %v1385, %v1497
        %v1514 = vsub.f32 %v1386, %v1498
        %v1515 = vsub.f32 %v1387, %v1499
        %v1516 = vsub.f32 %v1388, %v1500
        %v1517 = vsub.f32 %v1389, %v1501
        %v1518 = vsub.f32 %v1390, %v1502
        %v1519 = vsub.f32 %v1391, %v1503
        %v1520 = vsub.f32 %v1392, %v1504
        %v1521 = vsub.f32 %v1393, %v1505
        %v1522 = vsub.f32 %v1394, %v1506
        %v1523 = vsub.f32 %v1395, %v1507
        %v1524 = vsub.f32 %v1396, %v1508
        %v1525 = vmul.f32 %v1509, 1.442695
        %v1526 = vpow.pop %v1525
        %v1527 = vmul.f32 %v1510, 1.442695
        %v1528 = vpow.pop %v1527
        %v1529 = vmul.f32 %v1511, 1.442695
        %v1530 = vpow.pop %v1529
        %v1531 = vmul.f32 %v1512, 1.442695
        %v1532 = vpow.pop %v1531
        %v1533 = vmul.f32 %v1513, 1.442695
        %v1534 = vpow.pop %v1533
        %v1535 = vmul.f32 %v1514, 1.442695
        %v1536 = vpow.pop %v1535
        %v1537 = vmul.f32 %v1515, 1.442695
        %v1538 = vpow.pop %v1537
        %v1539 = vmul.f32 %v1516, 1.442695
        %v1540 = vpow.pop %v1539
        %v1541 = vmul.f32 %v1517, 1.442695
        %v1542 = vpow.pop %v1541
        %v1543 = vmul.f32 %v1518, 1.442695
        %v1544 = vpow.pop %v1543
        %v1545 = vmul.f32 %v1519, 1.442695
        %v1546 = vpow.pop %v1545
        %v1547 = vmul.f32 %v1520, 1.442695
        %v1548 = vpow.pop %v1547
        %v1549 = vmul.f32 %v1521, 1.442695
        %v1550 = vpow.pop %v1549
        %v1551 = vmul.f32 %v1522, 1.442695
        %v1552 = vpow.pop %v1551
        %v1553 = vmul.f32 %v1523, 1.442695
        %v1554 = vpow.pop %v1553
        %v1555 = vmul.f32 %v1524, 1.442695
        %v1556 = vpow.pop %v1555
        %v1557 = vld [vmem:[#allocation3] sm:$0xff]
        %v1558 = vld [vmem:[#allocation3 + $0x8] sm:$0xff]
        %v1559 = vld [vmem:[#allocation3 + $0x10] sm:$0xff]
        %v1560 = vld [vmem:[#allocation3 + $0x18] sm:$0xff]
        %v1561 = vld [vmem:[#allocation3 + $0x20] sm:$0xff]
        %v1562 = vld [vmem:[#allocation3 + $0x28] sm:$0xff]
        %v1563 = vld [vmem:[#allocation3 + $0x30] sm:$0xff]
        %v1564 = vld [vmem:[#allocation3 + $0x38] sm:$0xff]
        %v1565 = vld [vmem:[#allocation3 + $0x40] sm:$0xff]
        %v1566 = vld [vmem:[#allocation3 + $0x48] sm:$0xff]
        %v1567 = vld [vmem:[#allocation3 + $0x50] sm:$0xff]
        %v1568 = vld [vmem:[#allocation3 + $0x58] sm:$0xff]
        %v1569 = vld [vmem:[#allocation3 + $0x60] sm:$0xff]
        %v1570 = vld [vmem:[#allocation3 + $0x68] sm:$0xff]
        %v1571 = vld [vmem:[#allocation3 + $0x70] sm:$0xff]
        %v1572 = vld [vmem:[#allocation3 + $0x78] sm:$0xff]
        %v1573 = vmul.f32 %v1526, %v1557
        %v1574 = vmul.f32 %v1528, %v1558
        %v1575 = vmul.f32 %v1530, %v1559
        %v1576 = vmul.f32 %v1532, %v1560
        %v1577 = vmul.f32 %v1534, %v1561
        %v1578 = vmul.f32 %v1536, %v1562
        %v1579 = vmul.f32 %v1538, %v1563
        %v1580 = vmul.f32 %v1540, %v1564
        %v1581 = vmul.f32 %v1542, %v1565
        %v1582 = vmul.f32 %v1544, %v1566
        %v1583 = vmul.f32 %v1546, %v1567
        %v1584 = vmul.f32 %v1548, %v1568
        %v1585 = vmul.f32 %v1550, %v1569
        %v1586 = vmul.f32 %v1552, %v1570
        %v1587 = vmul.f32 %v1554, %v1571
        %v1588 = vmul.f32 %v1556, %v1572
        %1590 = vset.pattern.permute.xlu0 0
        %1591 = vperm.xlu0 %1590, %v1493
        %v1592 = vpop.permute.xlu0 %1591
        %1595 = vset.pattern.permute.xlu0 0
        %1596 = vperm.xlu0 %1595, %v1494
        %v1597 = vpop.permute.xlu0 %1596
        %1600 = vset.pattern.permute.xlu0 0
        %1601 = vperm.xlu0 %1600, %v1495
        %v1602 = vpop.permute.xlu0 %1601
        %1605 = vset.pattern.permute.xlu0 0
        %1606 = vperm.xlu0 %1605, %v1496
        %v1607 = vpop.permute.xlu0 %1606
        %1610 = vset.pattern.permute.xlu0 0
        %1611 = vperm.xlu0 %1610, %v1497
        %v1612 = vpop.permute.xlu0 %1611
        %1615 = vset.pattern.permute.xlu0 0
        %1616 = vperm.xlu0 %1615, %v1498
        %v1617 = vpop.permute.xlu0 %1616
        %1620 = vset.pattern.permute.xlu0 0
        %1621 = vperm.xlu0 %1620, %v1499
        %v1622 = vpop.permute.xlu0 %1621
        %1625 = vset.pattern.permute.xlu0 0
        %1626 = vperm.xlu0 %1625, %v1500
        %v1627 = vpop.permute.xlu0 %1626
        %1630 = vset.pattern.permute.xlu0 0
        %1631 = vperm.xlu0 %1630, %v1501
        %v1632 = vpop.permute.xlu0 %1631
        %1635 = vset.pattern.permute.xlu0 0
        %1636 = vperm.xlu0 %1635, %v1502
        %v1637 = vpop.permute.xlu0 %1636
        %1640 = vset.pattern.permute.xlu0 0
        %1641 = vperm.xlu0 %1640, %v1503
        %v1642 = vpop.permute.xlu0 %1641
        %1645 = vset.pattern.permute.xlu0 0
        %1646 = vperm.xlu0 %1645, %v1504
        %v1647 = vpop.permute.xlu0 %1646
        %1650 = vset.pattern.permute.xlu0 0
        %1651 = vperm.xlu0 %1650, %v1505
        %v1652 = vpop.permute.xlu0 %1651
        %1655 = vset.pattern.permute.xlu0 0
        %1656 = vperm.xlu0 %1655, %v1506
        %v1657 = vpop.permute.xlu0 %1656
        %1660 = vset.pattern.permute.xlu0 0
        %1661 = vperm.xlu0 %1660, %v1507
        %v1662 = vpop.permute.xlu0 %1661
        %1665 = vset.pattern.permute.xlu0 0
        %1666 = vperm.xlu0 %1665, %v1508
        %v1667 = vpop.permute.xlu0 %1666
        %v1669 = vsub.f32 %v1301, %v1592
        %v1670 = vsub.f32 %v1302, %v1592
        %v1671 = vsub.f32 %v1303, %v1592
        %v1672 = vsub.f32 %v1304, %v1592
        %v1673 = vsub.f32 %v1305, %v1592
        %v1674 = vsub.f32 %v1306, %v1597
        %v1675 = vsub.f32 %v1307, %v1597
        %v1676 = vsub.f32 %v1308, %v1597
        %v1677 = vsub.f32 %v1309, %v1597
        %v1678 = vsub.f32 %v1310, %v1597
        %v1679 = vsub.f32 %v1311, %v1602
        %v1680 = vsub.f32 %v1312, %v1602
        %v1681 = vsub.f32 %v1313, %v1602
        %v1682 = vsub.f32 %v1314, %v1602
        %v1683 = vsub.f32 %v1315, %v1602
        %v1684 = vsub.f32 %v1316, %v1607
        %v1685 = vsub.f32 %v1317, %v1607
        %v1686 = vsub.f32 %v1318, %v1607
        %v1687 = vsub.f32 %v1319, %v1607
        %v1688 = vsub.f32 %v1320, %v1607
        %v1689 = vsub.f32 %v1321, %v1612
        %v1690 = vsub.f32 %v1322, %v1612
        %v1691 = vsub.f32 %v1323, %v1612
        %v1692 = vsub.f32 %v1324, %v1612
        %v1693 = vsub.f32 %v1325, %v1612
        %v1694 = vsub.f32 %v1326, %v1617
        %v1695 = vsub.f32 %v1327, %v1617
        %v1696 = vsub.f32 %v1328, %v1617
        %v1697 = vsub.f32 %v1329, %v1617
        %v1698 = vsub.f32 %v1330, %v1617
        %v1699 = vsub.f32 %v1331, %v1622
        %v1700 = vsub.f32 %v1332, %v1622
        %v1701 = vsub.f32 %v1333, %v1622
        %v1702 = vsub.f32 %v1334, %v1622
        %v1703 = vsub.f32 %v1335, %v1622
        %v1704 = vsub.f32 %v1336, %v1627
        %v1705 = vsub.f32 %v1337, %v1627
        %v1706 = vsub.f32 %v1338, %v1627
        %v1707 = vsub.f32 %v1339, %v1627
        %v1708 = vsub.f32 %v1340, %v1627
        %v1709 = vsub.f32 %v1341, %v1632
        %v1710 = vsub.f32 %v1342, %v1632
        %v1711 = vsub.f32 %v1343, %v1632
        %v1712 = vsub.f32 %v1344, %v1632
        %v1713 = vsub.f32 %v1345, %v1632
        %v1714 = vsub.f32 %v1346, %v1637
        %v1715 = vsub.f32 %v1347, %v1637
        %v1716 = vsub.f32 %v1348, %v1637
        %v1717 = vsub.f32 %v1349, %v1637
        %v1718 = vsub.f32 %v1350, %v1637
        %v1719 = vsub.f32 %v1351, %v1642
        %v1720 = vsub.f32 %v1352, %v1642
        %v1721 = vsub.f32 %v1353, %v1642
        %v1722 = vsub.f32 %v1354, %v1642
        %v1723 = vsub.f32 %v1355, %v1642
        %v1724 = vsub.f32 %v1356, %v1647
        %v1725 = vsub.f32 %v1357, %v1647
        %v1726 = vsub.f32 %v1358, %v1647
        %v1727 = vsub.f32 %v1359, %v1647
        %v1728 = vsub.f32 %v1360, %v1647
        %v1729 = vsub.f32 %v1361, %v1652
        %v1730 = vsub.f32 %v1362, %v1652
        %v1731 = vsub.f32 %v1363, %v1652
        %v1732 = vsub.f32 %v1364, %v1652
        %v1733 = vsub.f32 %v1365, %v1652
        %v1734 = vsub.f32 %v1366, %v1657
        %v1735 = vsub.f32 %v1367, %v1657
        %v1736 = vsub.f32 %v1368, %v1657
        %v1737 = vsub.f32 %v1369, %v1657
        %v1738 = vsub.f32 %v1370, %v1657
        %v1739 = vsub.f32 %v1371, %v1662
        %v1740 = vsub.f32 %v1372, %v1662
        %v1741 = vsub.f32 %v1373, %v1662
        %v1742 = vsub.f32 %v1374, %v1662
        %v1743 = vsub.f32 %v1375, %v1662
        %v1744 = vsub.f32 %v1376, %v1667
        %v1745 = vsub.f32 %v1377, %v1667
        %v1746 = vsub.f32 %v1378, %v1667
        %v1747 = vsub.f32 %v1379, %v1667
        %v1748 = vsub.f32 %v1380, %v1667
        %v1749 = vmul.f32 %v1669, 1.442695
        %v1750 = vpow.pop %v1749
        %v1751 = vmul.f32 %v1670, 1.442695
        %v1752 = vpow.pop %v1751
        %v1753 = vmul.f32 %v1671, 1.442695
        %v1754 = vpow.pop %v1753
        %v1755 = vmul.f32 %v1672, 1.442695
        %v1756 = vpow.pop %v1755
        %v1757 = vmul.f32 %v1673, 1.442695
        %v1758 = vpow.pop %v1757
        %v1759 = vmul.f32 %v1674, 1.442695
        %v1760 = vpow.pop %v1759
        %v1761 = vmul.f32 %v1675, 1.442695
        %v1762 = vpow.pop %v1761
        %v1763 = vmul.f32 %v1676, 1.442695
        %v1764 = vpow.pop %v1763
        %v1765 = vmul.f32 %v1677, 1.442695
        %v1766 = vpow.pop %v1765
        %v1767 = vmul.f32 %v1678, 1.442695
        %v1768 = vpow.pop %v1767
        %v1769 = vmul.f32 %v1679, 1.442695
        %v1770 = vpow.pop %v1769
        %v1771 = vmul.f32 %v1680, 1.442695
        %v1772 = vpow.pop %v1771
        %v1773 = vmul.f32 %v1681, 1.442695
        %v1774 = vpow.pop %v1773
        %v1775 = vmul.f32 %v1682, 1.442695
        %v1776 = vpow.pop %v1775
        %v1777 = vmul.f32 %v1683, 1.442695
        %v1778 = vpow.pop %v1777
        %v1779 = vmul.f32 %v1684, 1.442695
        %v1780 = vpow.pop %v1779
        %v1781 = vmul.f32 %v1685, 1.442695
        %v1782 = vpow.pop %v1781
        %v1783 = vmul.f32 %v1686, 1.442695
        %v1784 = vpow.pop %v1783
        %v1785 = vmul.f32 %v1687, 1.442695
        %v1786 = vpow.pop %v1785
        %v1787 = vmul.f32 %v1688, 1.442695
        %v1788 = vpow.pop %v1787
        %v1789 = vmul.f32 %v1689, 1.442695
        %v1790 = vpow.pop %v1789
        %v1791 = vmul.f32 %v1690, 1.442695
        %v1792 = vpow.pop %v1791
        %v1793 = vmul.f32 %v1691, 1.442695
        %v1794 = vpow.pop %v1793
        %v1795 = vmul.f32 %v1692, 1.442695
        %v1796 = vpow.pop %v1795
        %v1797 = vmul.f32 %v1693, 1.442695
        %v1798 = vpow.pop %v1797
        %v1799 = vmul.f32 %v1694, 1.442695
        %v1800 = vpow.pop %v1799
        %v1801 = vmul.f32 %v1695, 1.442695
        %v1802 = vpow.pop %v1801
        %v1803 = vmul.f32 %v1696, 1.442695
        %v1804 = vpow.pop %v1803
        %v1805 = vmul.f32 %v1697, 1.442695
        %v1806 = vpow.pop %v1805
        %v1807 = vmul.f32 %v1698, 1.442695
        %v1808 = vpow.pop %v1807
        %v1809 = vmul.f32 %v1699, 1.442695
        %v1810 = vpow.pop %v1809
        %v1811 = vmul.f32 %v1700, 1.442695
        %v1812 = vpow.pop %v1811
        %v1813 = vmul.f32 %v1701, 1.442695
        %v1814 = vpow.pop %v1813
        %v1815 = vmul.f32 %v1702, 1.442695
        %v1816 = vpow.pop %v1815
        %v1817 = vmul.f32 %v1703, 1.442695
        %v1818 = vpow.pop %v1817
        %v1819 = vmul.f32 %v1704, 1.442695
        %v1820 = vpow.pop %v1819
        %v1821 = vmul.f32 %v1705, 1.442695
        %v1822 = vpow.pop %v1821
        %v1823 = vmul.f32 %v1706, 1.442695
        %v1824 = vpow.pop %v1823
        %v1825 = vmul.f32 %v1707, 1.442695
        %v1826 = vpow.pop %v1825
        %v1827 = vmul.f32 %v1708, 1.442695
        %v1828 = vpow.pop %v1827
        %v1829 = vmul.f32 %v1709, 1.442695
        %v1830 = vpow.pop %v1829
        %v1831 = vmul.f32 %v1710, 1.442695
        %v1832 = vpow.pop %v1831
        %v1833 = vmul.f32 %v1711, 1.442695
        %v1834 = vpow.pop %v1833
        %v1835 = vmul.f32 %v1712, 1.442695
        %v1836 = vpow.pop %v1835
        %v1837 = vmul.f32 %v1713, 1.442695
        %v1838 = vpow.pop %v1837
        %v1839 = vmul.f32 %v1714, 1.442695
        %v1840 = vpow.pop %v1839
        %v1841 = vmul.f32 %v1715, 1.442695
        %v1842 = vpow.pop %v1841
        %v1843 = vmul.f32 %v1716, 1.442695
        %v1844 = vpow.pop %v1843
        %v1845 = vmul.f32 %v1717, 1.442695
        %v1846 = vpow.pop %v1845
        %v1847 = vmul.f32 %v1718, 1.442695
        %v1848 = vpow.pop %v1847
        %v1849 = vmul.f32 %v1719, 1.442695
        %v1850 = vpow.pop %v1849
        %v1851 = vmul.f32 %v1720, 1.442695
        %v1852 = vpow.pop %v1851
        %v1853 = vmul.f32 %v1721, 1.442695
        %v1854 = vpow.pop %v1853
        %v1855 = vmul.f32 %v1722, 1.442695
        %v1856 = vpow.pop %v1855
        %v1857 = vmul.f32 %v1723, 1.442695
        %v1858 = vpow.pop %v1857
        %v1859 = vmul.f32 %v1724, 1.442695
        %v1860 = vpow.pop %v1859
        %v1861 = vmul.f32 %v1725, 1.442695
        %v1862 = vpow.pop %v1861
        %v1863 = vmul.f32 %v1726, 1.442695
        %v1864 = vpow.pop %v1863
        %v1865 = vmul.f32 %v1727, 1.442695
        %v1866 = vpow.pop %v1865
        %v1867 = vmul.f32 %v1728, 1.442695
        %v1868 = vpow.pop %v1867
        %v1869 = vmul.f32 %v1729, 1.442695
        %v1870 = vpow.pop %v1869
        %v1871 = vmul.f32 %v1730, 1.442695
        %v1872 = vpow.pop %v1871
        %v1873 = vmul.f32 %v1731, 1.442695
        %v1874 = vpow.pop %v1873
        %v1875 = vmul.f32 %v1732, 1.442695
        %v1876 = vpow.pop %v1875
        %v1877 = vmul.f32 %v1733, 1.442695
        %v1878 = vpow.pop %v1877
        %v1879 = vmul.f32 %v1734, 1.442695
        %v1880 = vpow.pop %v1879
        %v1881 = vmul.f32 %v1735, 1.442695
        %v1882 = vpow.pop %v1881
        %v1883 = vmul.f32 %v1736, 1.442695
        %v1884 = vpow.pop %v1883
        %v1885 = vmul.f32 %v1737, 1.442695
        %v1886 = vpow.pop %v1885
        %v1887 = vmul.f32 %v1738, 1.442695
        %v1888 = vpow.pop %v1887
        %v1889 = vmul.f32 %v1739, 1.442695
        %v1890 = vpow.pop %v1889
        %v1891 = vmul.f32 %v1740, 1.442695
        %v1892 = vpow.pop %v1891
        %v1893 = vmul.f32 %v1741, 1.442695
        %v1894 = vpow.pop %v1893
        %v1895 = vmul.f32 %v1742, 1.442695
        %v1896 = vpow.pop %v1895
        %v1897 = vmul.f32 %v1743, 1.442695
        %v1898 = vpow.pop %v1897
        %v1899 = vmul.f32 %v1744, 1.442695
        %v1900 = vpow.pop %v1899
        %v1901 = vmul.f32 %v1745, 1.442695
        %v1902 = vpow.pop %v1901
        %v1903 = vmul.f32 %v1746, 1.442695
        %v1904 = vpow.pop %v1903
        %v1905 = vmul.f32 %v1747, 1.442695
        %v1906 = vpow.pop %v1905
        %v1907 = vmul.f32 %v1748, 1.442695
        %v1908 = vpow.pop %v1907
        %v1909 = vadd.f32 %v1750, %v1752
        %v1910 = vadd.f32 %v1909, %v1754
        %v1911 = vadd.f32 %v1910, %v1756
        %v1912 = vadd.f32 %v1911, %v1758
        %1913 = vadd.xlane.f32.xlu0 %v1912
        %v1914 = vpop.xlane.xlu0 %1913
        %v1915 = vadd.f32 %v1760, %v1762
        %v1916 = vadd.f32 %v1915, %v1764
        %v1917 = vadd.f32 %v1916, %v1766
        %v1918 = vadd.f32 %v1917, %v1768
        %1919 = vadd.xlane.f32.xlu0 %v1918
        %v1920 = vpop.xlane.xlu0 %1919
        %v1921 = vadd.f32 %v1770, %v1772
        %v1922 = vadd.f32 %v1921, %v1774
        %v1923 = vadd.f32 %v1922, %v1776
        %v1924 = vadd.f32 %v1923, %v1778
        %1925 = vadd.xlane.f32.xlu0 %v1924
        %v1926 = vpop.xlane.xlu0 %1925
        %v1927 = vadd.f32 %v1780, %v1782
        %v1928 = vadd.f32 %v1927, %v1784
        %v1929 = vadd.f32 %v1928, %v1786
        %v1930 = vadd.f32 %v1929, %v1788
        %1931 = vadd.xlane.f32.xlu0 %v1930
        %v1932 = vpop.xlane.xlu0 %1931
        %v1933 = vadd.f32 %v1790, %v1792
        %v1934 = vadd.f32 %v1933, %v1794
        %v1935 = vadd.f32 %v1934, %v1796
        %v1936 = vadd.f32 %v1935, %v1798
        %1937 = vadd.xlane.f32.xlu0 %v1936
        %v1938 = vpop.xlane.xlu0 %1937
        %v1939 = vadd.f32 %v1800, %v1802
        %v1940 = vadd.f32 %v1939, %v1804
        %v1941 = vadd.f32 %v1940, %v1806
        %v1942 = vadd.f32 %v1941, %v1808
        %1943 = vadd.xlane.f32.xlu0 %v1942
        %v1944 = vpop.xlane.xlu0 %1943
        %v1945 = vadd.f32 %v1810, %v1812
        %v1946 = vadd.f32 %v1945, %v1814
        %v1947 = vadd.f32 %v1946, %v1816
        %v1948 = vadd.f32 %v1947, %v1818
        %1949 = vadd.xlane.f32.xlu0 %v1948
        %v1950 = vpop.xlane.xlu0 %1949
        %v1951 = vadd.f32 %v1820, %v1822
        %v1952 = vadd.f32 %v1951, %v1824
        %v1953 = vadd.f32 %v1952, %v1826
        %v1954 = vadd.f32 %v1953, %v1828
        %1955 = vadd.xlane.f32.xlu0 %v1954
        %v1956 = vpop.xlane.xlu0 %1955
        %v1957 = vadd.f32 %v1830, %v1832
        %v1958 = vadd.f32 %v1957, %v1834
        %v1959 = vadd.f32 %v1958, %v1836
        %v1960 = vadd.f32 %v1959, %v1838
        %1961 = vadd.xlane.f32.xlu0 %v1960
        %v1962 = vpop.xlane.xlu0 %1961
        %v1963 = vadd.f32 %v1840, %v1842
        %v1964 = vadd.f32 %v1963, %v1844
        %v1965 = vadd.f32 %v1964, %v1846
        %v1966 = vadd.f32 %v1965, %v1848
        %1967 = vadd.xlane.f32.xlu0 %v1966
        %v1968 = vpop.xlane.xlu0 %1967
        %v1969 = vadd.f32 %v1850, %v1852
        %v1970 = vadd.f32 %v1969, %v1854
        %v1971 = vadd.f32 %v1970, %v1856
        %v1972 = vadd.f32 %v1971, %v1858
        %1973 = vadd.xlane.f32.xlu0 %v1972
        %v1974 = vpop.xlane.xlu0 %1973
        %v1975 = vadd.f32 %v1860, %v1862
        %v1976 = vadd.f32 %v1975, %v1864
        %v1977 = vadd.f32 %v1976, %v1866
        %v1978 = vadd.f32 %v1977, %v1868
        %1979 = vadd.xlane.f32.xlu0 %v1978
        %v1980 = vpop.xlane.xlu0 %1979
        %v1981 = vadd.f32 %v1870, %v1872
        %v1982 = vadd.f32 %v1981, %v1874
        %v1983 = vadd.f32 %v1982, %v1876
        %v1984 = vadd.f32 %v1983, %v1878
        %1985 = vadd.xlane.f32.xlu0 %v1984
        %v1986 = vpop.xlane.xlu0 %1985
        %v1987 = vadd.f32 %v1880, %v1882
        %v1988 = vadd.f32 %v1987, %v1884
        %v1989 = vadd.f32 %v1988, %v1886
        %v1990 = vadd.f32 %v1989, %v1888
        %1991 = vadd.xlane.f32.xlu0 %v1990
        %v1992 = vpop.xlane.xlu0 %1991
        %v1993 = vadd.f32 %v1890, %v1892
        %v1994 = vadd.f32 %v1993, %v1894
        %v1995 = vadd.f32 %v1994, %v1896
        %v1996 = vadd.f32 %v1995, %v1898
        %1997 = vadd.xlane.f32.xlu0 %v1996
        %v1998 = vpop.xlane.xlu0 %1997
        %v1999 = vadd.f32 %v1900, %v1902
        %v2000 = vadd.f32 %v1999, %v1904
        %v2001 = vadd.f32 %v2000, %v1906
        %v2002 = vadd.f32 %v2001, %v1908
        %2003 = vadd.xlane.f32.xlu0 %v2002
        %v2004 = vpop.xlane.xlu0 %2003
        %v2005 = vadd.f32 %v1573, %v1914
        %v2006 = vadd.f32 %v1574, %v1920
        %v2007 = vadd.f32 %v1575, %v1926
        %v2008 = vadd.f32 %v1576, %v1932
        %v2009 = vadd.f32 %v1577, %v1938
        %v2010 = vadd.f32 %v1578, %v1944
        %v2011 = vadd.f32 %v1579, %v1950
        %v2012 = vadd.f32 %v1580, %v1956
        %v2013 = vadd.f32 %v1581, %v1962
        %v2014 = vadd.f32 %v1582, %v1968
        %v2015 = vadd.f32 %v1583, %v1974
        %v2016 = vadd.f32 %v1584, %v1980
        %v2017 = vadd.f32 %v1585, %v1986
        %v2018 = vadd.f32 %v1586, %v1992
        %v2019 = vadd.f32 %v1587, %v1998
        %v2020 = vadd.f32 %v1588, %v2004
        %vm2021 = vcmask 7168
        %2022 = vst.msk [vmem:[#allocation3] sm:$0xff] %vm2021, %v2005
        %2023 = vst.msk [vmem:[#allocation3 + $0x8] sm:$0xff] %vm2021, %v2006
        %2024 = vst.msk [vmem:[#allocation3 + $0x10] sm:$0xff] %vm2021, %v2007
        %2025 = vst.msk [vmem:[#allocation3 + $0x18] sm:$0xff] %vm2021, %v2008
        %2026 = vst.msk [vmem:[#allocation3 + $0x20] sm:$0xff] %vm2021, %v2009
        %2027 = vst.msk [vmem:[#allocation3 + $0x28] sm:$0xff] %vm2021, %v2010
        %2028 = vst.msk [vmem:[#allocation3 + $0x30] sm:$0xff] %vm2021, %v2011
        %2029 = vst.msk [vmem:[#allocation3 + $0x38] sm:$0xff] %vm2021, %v2012
        %2030 = vst.msk [vmem:[#allocation3 + $0x40] sm:$0xff] %vm2021, %v2013
        %2031 = vst.msk [vmem:[#allocation3 + $0x48] sm:$0xff] %vm2021, %v2014
        %2032 = vst.msk [vmem:[#allocation3 + $0x50] sm:$0xff] %vm2021, %v2015
        %2033 = vst.msk [vmem:[#allocation3 + $0x58] sm:$0xff] %vm2021, %v2016
        %2034 = vst.msk [vmem:[#allocation3 + $0x60] sm:$0xff] %vm2021, %v2017
        %2035 = vst.msk [vmem:[#allocation3 + $0x68] sm:$0xff] %vm2021, %v2018
        %2036 = vst.msk [vmem:[#allocation3 + $0x70] sm:$0xff] %vm2021, %v2019
        %2037 = vst.msk [vmem:[#allocation3 + $0x78] sm:$0xff] %vm2021, %v2020
        %2038 = vst.msk [vmem:[#allocation2] sm:$0xff] %vm2021, %v1493
        %2039 = vst.msk [vmem:[#allocation2 + $0x8] sm:$0xff] %vm2021, %v1494
        %2040 = vst.msk [vmem:[#allocation2 + $0x10] sm:$0xff] %vm2021, %v1495
        %2041 = vst.msk [vmem:[#allocation2 + $0x18] sm:$0xff] %vm2021, %v1496
        %2042 = vst.msk [vmem:[#allocation2 + $0x20] sm:$0xff] %vm2021, %v1497
        %2043 = vst.msk [vmem:[#allocation2 + $0x28] sm:$0xff] %vm2021, %v1498
        %2044 = vst.msk [vmem:[#allocation2 + $0x30] sm:$0xff] %vm2021, %v1499
        %2045 = vst.msk [vmem:[#allocation2 + $0x38] sm:$0xff] %vm2021, %v1500
        %2046 = vst.msk [vmem:[#allocation2 + $0x40] sm:$0xff] %vm2021, %v1501
        %2047 = vst.msk [vmem:[#allocation2 + $0x48] sm:$0xff] %vm2021, %v1502
        %2048 = vst.msk [vmem:[#allocation2 + $0x50] sm:$0xff] %vm2021, %v1503
        %2049 = vst.msk [vmem:[#allocation2 + $0x58] sm:$0xff] %vm2021, %v1504
        %2050 = vst.msk [vmem:[#allocation2 + $0x60] sm:$0xff] %vm2021, %v1505
        %2051 = vst.msk [vmem:[#allocation2 + $0x68] sm:$0xff] %vm2021, %v1506
        %2052 = vst.msk [vmem:[#allocation2 + $0x70] sm:$0xff] %vm2021, %v1507
        %2053 = vst.msk [vmem:[#allocation2 + $0x78] sm:$0xff] %vm2021, %v1508
        // Predicated region
        $region41: #{tpu_custom_call.1} parent=27 // pred_check
          %p2054 = pneg %p203
        $region42: #{tpu_custom_call.1} parent=27 // pred_check_branch
          %2056 = sbr.rel (%p2054) target = $region44
        $region43: #{tpu_custom_call.1} parent=27 // pred_region
          %v2057 = vld [vmem:[#allocation2] sm:$0xff]
          %v2058 = vld [vmem:[#allocation2 + $0x8] sm:$0xff]
          %v2059 = vld [vmem:[#allocation2 + $0x10] sm:$0xff]
          %v2060 = vld [vmem:[#allocation2 + $0x18] sm:$0xff]
          %v2061 = vld [vmem:[#allocation2 + $0x20] sm:$0xff]
          %v2062 = vld [vmem:[#allocation2 + $0x28] sm:$0xff]
          %v2063 = vld [vmem:[#allocation2 + $0x30] sm:$0xff]
          %v2064 = vld [vmem:[#allocation2 + $0x38] sm:$0xff]
          %v2065 = vld [vmem:[#allocation2 + $0x40] sm:$0xff]
          %v2066 = vld [vmem:[#allocation2 + $0x48] sm:$0xff]
          %v2067 = vld [vmem:[#allocation2 + $0x50] sm:$0xff]
          %v2068 = vld [vmem:[#allocation2 + $0x58] sm:$0xff]
          %v2069 = vld [vmem:[#allocation2 + $0x60] sm:$0xff]
          %v2070 = vld [vmem:[#allocation2 + $0x68] sm:$0xff]
          %v2071 = vld [vmem:[#allocation2 + $0x70] sm:$0xff]
          %v2072 = vld [vmem:[#allocation2 + $0x78] sm:$0xff]
          %v2073 = vld [vmem:[#allocation3] sm:$0xff]
          %v2074 = vld [vmem:[#allocation3 + $0x8] sm:$0xff]
          %v2075 = vld [vmem:[#allocation3 + $0x10] sm:$0xff]
          %v2076 = vld [vmem:[#allocation3 + $0x18] sm:$0xff]
          %v2077 = vld [vmem:[#allocation3 + $0x20] sm:$0xff]
          %v2078 = vld [vmem:[#allocation3 + $0x28] sm:$0xff]
          %v2079 = vld [vmem:[#allocation3 + $0x30] sm:$0xff]
          %v2080 = vld [vmem:[#allocation3 + $0x38] sm:$0xff]
          %v2081 = vld [vmem:[#allocation3 + $0x40] sm:$0xff]
          %v2082 = vld [vmem:[#allocation3 + $0x48] sm:$0xff]
          %v2083 = vld [vmem:[#allocation3 + $0x50] sm:$0xff]
          %v2084 = vld [vmem:[#allocation3 + $0x58] sm:$0xff]
          %v2085 = vld [vmem:[#allocation3 + $0x60] sm:$0xff]
          %v2086 = vld [vmem:[#allocation3 + $0x68] sm:$0xff]
          %v2087 = vld [vmem:[#allocation3 + $0x70] sm:$0xff]
          %v2088 = vld [vmem:[#allocation3 + $0x78] sm:$0xff]
          %v2089 = vlog2.pop %v2073
          %v2090 = vmul.f32 %v2089, 0.6931472
          %v2091 = vlog2.pop %v2074
          %v2092 = vmul.f32 %v2091, 0.6931472
          %v2093 = vlog2.pop %v2075
          %v2094 = vmul.f32 %v2093, 0.6931472
          %v2095 = vlog2.pop %v2076
          %v2096 = vmul.f32 %v2095, 0.6931472
          %v2097 = vlog2.pop %v2077
          %v2098 = vmul.f32 %v2097, 0.6931472
          %v2099 = vlog2.pop %v2078
          %v2100 = vmul.f32 %v2099, 0.6931472
          %v2101 = vlog2.pop %v2079
          %v2102 = vmul.f32 %v2101, 0.6931472
          %v2103 = vlog2.pop %v2080
          %v2104 = vmul.f32 %v2103, 0.6931472
          %v2105 = vlog2.pop %v2081
          %v2106 = vmul.f32 %v2105, 0.6931472
          %v2107 = vlog2.pop %v2082
          %v2108 = vmul.f32 %v2107, 0.6931472
          %v2109 = vlog2.pop %v2083
          %v2110 = vmul.f32 %v2109, 0.6931472
          %v2111 = vlog2.pop %v2084
          %v2112 = vmul.f32 %v2111, 0.6931472
          %v2113 = vlog2.pop %v2085
          %v2114 = vmul.f32 %v2113, 0.6931472
          %v2115 = vlog2.pop %v2086
          %v2116 = vmul.f32 %v2115, 0.6931472
          %v2117 = vlog2.pop %v2087
          %v2118 = vmul.f32 %v2117, 0.6931472
          %v2119 = vlog2.pop %v2088
          %v2120 = vmul.f32 %v2119, 0.6931472
          %v2121 = vadd.f32 %v2057, %v2090
          %v2122 = vadd.f32 %v2058, %v2092
          %v2123 = vadd.f32 %v2059, %v2094
          %v2124 = vadd.f32 %v2060, %v2096
          %v2125 = vadd.f32 %v2061, %v2098
          %v2126 = vadd.f32 %v2062, %v2100
          %v2127 = vadd.f32 %v2063, %v2102
          %v2128 = vadd.f32 %v2064, %v2104
          %v2129 = vadd.f32 %v2065, %v2106
          %v2130 = vadd.f32 %v2066, %v2108
          %v2131 = vadd.f32 %v2067, %v2110
          %v2132 = vadd.f32 %v2068, %v2112
          %v2133 = vadd.f32 %v2069, %v2114
          %v2134 = vadd.f32 %v2070, %v2116
          %v2135 = vadd.f32 %v2071, %v2118
          %v2136 = vadd.f32 %v2072, %v2120
          %2137 = vst.msk [vmem:[%s200] sm:$0xff] %vm2021, %v2121
          %2138 = vst.msk [vmem:[%s200 + $0x8] sm:$0xff] %vm2021, %v2122
          %2139 = vst.msk [vmem:[%s200 + $0x10] sm:$0xff] %vm2021, %v2123
          %2140 = vst.msk [vmem:[%s200 + $0x18] sm:$0xff] %vm2021, %v2124
          %2141 = vst.msk [vmem:[%s200 + $0x20] sm:$0xff] %vm2021, %v2125
          %2142 = vst.msk [vmem:[%s200 + $0x28] sm:$0xff] %vm2021, %v2126
          %2143 = vst.msk [vmem:[%s200 + $0x30] sm:$0xff] %vm2021, %v2127
          %2144 = vst.msk [vmem:[%s200 + $0x38] sm:$0xff] %vm2021, %v2128
          %2145 = vst.msk [vmem:[%s200 + $0x40] sm:$0xff] %vm2021, %v2129
          %2146 = vst.msk [vmem:[%s200 + $0x48] sm:$0xff] %vm2021, %v2130
          %2147 = vst.msk [vmem:[%s200 + $0x50] sm:$0xff] %vm2021, %v2131
          %2148 = vst.msk [vmem:[%s200 + $0x58] sm:$0xff] %vm2021, %v2132
          %2149 = vst.msk [vmem:[%s200 + $0x60] sm:$0xff] %vm2021, %v2133
          %2150 = vst.msk [vmem:[%s200 + $0x68] sm:$0xff] %vm2021, %v2134
          %2151 = vst.msk [vmem:[%s200 + $0x70] sm:$0xff] %vm2021, %v2135
          %2152 = vst.msk [vmem:[%s200 + $0x78] sm:$0xff] %vm2021, %v2136
        $region44: #{tpu_custom_call.1} parent=27 // pred_fallthru
          _
        %s2153 = smul.u32 16, %s21
        %p2154 = scmp.lt.s32.totalorder %s2153, 79
        %s2155 = scalar_select %p2154, %s2153, 79
        %s2156 = smul.addr %s2155, 8
        %s2157 = scalar_lea.vmem %s2, %s2156
        // Predicated region
        $region45: #{tpu_custom_call.1} parent=27 // pred_check
          %p2158 = pneg %p99
        $region46: #{tpu_custom_call.1} parent=27 // pred_check_branch
          %2160 = sbr.rel (%p2158) target = $region48
        $region47: #{tpu_custom_call.1} parent=27 // pred_region
          %s2161 = smul.u32 16, %s21
        $region48: #{tpu_custom_call.1} parent=27 // pred_fallthru
          _
      $region28: #{tpu_custom_call.1} parent=5 // pred_fallthru
        _
      %p2162 = scmp.le.s32.totalorder 2, %s12
      // Predicated region
      $region49: #{tpu_custom_call.1} parent=5 // pred_check
        %p2163 = pneg %p2162
      $region50: #{tpu_custom_call.1} parent=5 // pred_check_branch
        %2165 = sbr.rel (%p2163) target = $region52
      $region51: #{tpu_custom_call.1} parent=5 // pred_region
        %s2166 = ssub.s32 %s12, 2
        // Predicated region
        $region53: #{tpu_custom_call.1} parent=51 // pred_check
          %p2167 = pneg %p105
        $region54: #{tpu_custom_call.1} parent=51 // pred_check_branch
          %2169 = sbr.rel (%p2167) target = $region56
        $region55: #{tpu_custom_call.1} parent=51 // pred_region
          %s2170 = smul.u32 16, %s23
          %p2171 = scmp.lt.s32.totalorder %s2170, 79
          %s2172 = scalar_select %p2171, %s2170, 79
          %s2173 = smul.addr %s2172, 8
          %s2174 = scalar_lea.vmem %s2, %s2173
        $region56: #{tpu_custom_call.1} parent=51 // pred_fallthru
          _
      $region52: #{tpu_custom_call.1} parent=5 // pred_fallthru
        _
    $region6: #{tpu_custom_call.1} parent=1 // loop_footer
      %s16 = sadd.s32 1, %s12
    $region7: #{tpu_custom_call.1} parent=1 // loop_footer_branch
      %11 = sbr.rel target = $region3
    $region8: #{tpu_custom_call.1} parent=1 // loop_exit
      _
    %2175 = vsyncpa [#allocation5], 1
    %s2176 = scalar_lea.sflag [#allocation5], 1
    %2177 = vsyncpa %s2176, 1
    %2178 = vsyncpa [#allocation7], 1

</llo_original>
